<compile_context>
chip_gen: v6e
topology: v6e:2x2x1
jax: 0.10.0
libtpu: 0.0.40
codegen_flags: <defaults>
</compile_context>

<pallas_src>
import functools

import jax
import jax.numpy as jnp
from jax.experimental import pallas as pl
from jax.experimental.pallas import tpu as pltpu


# --------------------- Fused kernel: Conv1d + ReLU + MaxPool + LSTM(2) + FC ---------------------
def cnn_lstm_kernel(x_ref, p_ref, o_ref, xp_ref, hcat_ref, *, F, K, H):
    # x_ref    : (Bt, T, Cin)   batch tile, channels-last
    # p_ref    : (R, W)         packed parameters (layout mirrors the wrapper's packing order)
    # o_ref    : (1, Bt)        lane-dense output row (wrapper reshapes to (B, 1))
    # xp_ref   : (Bt, T+2, Cin) scratch: zero-padded input
    # hcat_ref : (Bt, 2H)       scratch: persistent [h0 | h1] for the fused recurrent matmul
    Bt, T, Cin = x_ref.shape
    KC = K * Cin
    H3, H4, H8 = 3 * H, 4 * H, 8 * H
    T_out = T + 2 - K + 1        # Conv1d output length with padding=1
    Tp = T_out // 2              # MaxPool1d(2, 2) floors odd lengths (PyTorch semantics)

    # ---- Unpack the single packed parameter buffer (static row slices; one prologue DMA) ----
    r = 0
    wconv = p_ref[r:r + KC, 0:F];       r += KC       # (K*Cin, F), row = k*Cin + c
    bconv = p_ref[r:r + 1, 0:F];        r += 1        # (1, F)
    wih0  = p_ref[r:r + F, 0:H4];       r += F        # (F, 4H), gate cols [i|f|o|g]
    b0    = p_ref[r:r + 1, 0:H4];       r += 1        # (1, 4H) = b_ih0 + b_hh0
    wcomb = p_ref[r:r + 2 * H, 0:H8];   r += 2 * H    # (2H, 8H) = [[whh0, wih1], [0, whh1]]
    b1    = p_ref[r:r + 1, 0:H4];       r += 1        # (1, 4H) = b_ih1 + b_hh1
    fcw   = p_ref[r:r + 1, 0:H];        r += 1        # (1, H)
    fcb   = p_ref[r:r + 1, 0:1]                       # (1, 1)

    # ---- Conv1d(padding=1): pad once into VMEM scratch, im2col -> ONE MXU matmul ----
    xp_ref[...] = jnp.zeros(xp_ref.shape, jnp.float32)
    xp_ref[:, 1:T + 1, :] = x_ref[...]
    xp = xp_ref[...]
    im2col = jnp.concatenate([xp[:, k:k + T_out, :] for k in range(K)], axis=-1)
    im2col = im2col.reshape(Bt * T_out, KC)
    y = jnp.dot(im2col, wconv, preferred_element_type=jnp.float32) + bconv
    y = jnp.maximum(y, 0.0)                                              # ReLU

    # ---- MaxPool1d(2, 2): one VPU max over the two pool taps ----
    y4 = y.reshape(Bt, T_out, F)[:, :2 * Tp, :].reshape(Bt, Tp, 2, F)
    pooled = jnp.maximum(y4[:, :, 0, :], y4[:, :, 1, :])                 # (Bt, Tp, F)

    # ---- Hoist layer-0 input projection out of the recurrence (one matmul for all steps) ----
    g0_pre = (jnp.dot(pooled.reshape(Bt * Tp, F), wih0, preferred_element_type=jnp.float32)
              + b0).reshape(Bt, Tp, H4)

    def cell(gates, c):
        # Gate order [i, f, o, g]: one sigmoid over 3H lanes, one tanh over H.
        sig = jax.nn.sigmoid(gates[:, 0:H3])
        g = jnp.tanh(gates[:, H3:H4])
        i, f, o = sig[:, 0:H], sig[:, H:2 * H], sig[:, 2 * H:H3]
        c_new = f * c + i * g
        return o * jnp.tanh(c_new), c_new

    # ---- 2-layer LSTM recurrence, fully unrolled; ONE fused MXU matmul per step ----
    # combo = [h0_t | h1_{t-1}] @ wcomb:
    #   cols 0:4H  = h0_t @ whh0                 (layer-0 recurrent term for step t+1)
    #   cols 4H:8H = h0_t @ wih1 + h1_{t-1}@whh1 (layer-1 gate pre-activations for step t)
    zero_bh = jnp.zeros((Bt, H), jnp.float32)
    hcat_ref[...] = jnp.zeros(hcat_ref.shape, jnp.float32)
    h0, c0 = cell(g0_pre[:, 0, :], zero_bh)        # t = 0: h0_prev == 0 -> skip h0 @ whh0
    hcat_ref[:, 0:H] = h0
    h1, c1 = zero_bh, zero_bh
    for t in range(Tp):                            # Tp is small & static -> unrolled for LLO
        combo = jnp.dot(hcat_ref[...], wcomb, preferred_element_type=jnp.float32)
        h1, c1 = cell(combo[:, H4:H8] + b1, c1)    # layer-1, step t
        hcat_ref[:, H:2 * H] = h1
        if t + 1 < Tp:
            h0, c0 = cell(g0_pre[:, t + 1, :] + combo[:, 0:H4], c0)   # layer-0, step t+1
            hcat_ref[:, 0:H] = h0

    # ---- Final Linear (out_features=1), emitted lane-dense as a (1, Bt) row ----
    o_ref[...] = (jnp.einsum("oh,bh->ob", fcw, h1, preferred_element_type=jnp.float32) + fcb)


# ------------------------------------------ Wrapper ------------------------------------------
def _reorder_gates(w, H):
    """PyTorch LSTM packs gates [i; f; g; o] along dim 0; reorder to [i; f; o; g]."""
    return jnp.concatenate([w[0:H], w[H:2 * H], w[3 * H:4 * H], w[2 * H:3 * H]], axis=0)


def cnn_lstm_forward(x, params):
    """x: (B, T, input_size) float32 -> (B, 1) float32 (eval-mode forward)."""
    B, T, Cin = x.shape
    conv_w, conv_b = params["conv_w"], params["conv_b"]          # (F, Cin, K), (F,)
    F = conv_w.shape[0]
    K = conv_w.shape[2]
    H = params["w_hh0"].shape[1]
    KC = K * Cin
    H4, H8 = 4 * H, 8 * H
    T_out = T + 2 - K + 1
    Tp = T_out // 2
    assert Tp >= 1, "sequence too short after conv + pool"

    # ---- Parameter re-layout (tiny one-time XLA ops) + pack into ONE buffer (one DMA) ----
    wconv = jnp.transpose(conv_w, (2, 1, 0)).reshape(KC, F)      # row = k*Cin + c
    wih0 = _reorder_gates(params["w_ih0"], H).T                  # (F, 4H)  cols [i|f|o|g]
    whh0 = _reorder_gates(params["w_hh0"], H).T                  # (H, 4H)
    wih1 = _reorder_gates(params["w_ih1"], H).T                  # (H, 4H)
    whh1 = _reorder_gates(params["w_hh1"], H).T                  # (H, 4H)
    b0 = _reorder_gates(params["b_ih0"] + params["b_hh0"], H)    # (4H,)
    b1 = _reorder_gates(params["b_ih1"] + params["b_hh1"], H)    # (4H,)
    wcomb = jnp.concatenate(                                     # (2H, 8H)
        [jnp.concatenate([whh0, wih1], axis=1),
         jnp.concatenate([jnp.zeros((H, H4), jnp.float32), whh1], axis=1)], axis=0)

    W = max(H8, F, KC)
    R = KC + 1 + F + 1 + 2 * H + 1 + 1 + 1
    packed = jnp.zeros((R, W), jnp.float32)

    def put(buf, arr, row):
        return buf.at[row:row + arr.shape[0], 0:arr.shape[1]].set(arr), row + arr.shape[0]

    r = 0
    packed, r = put(packed, wconv, r)
    packed, r = put(packed, conv_b.reshape(1, F), r)
    packed, r = put(packed, wih0, r)
    packed, r = put(packed, b0.reshape(1, H4), r)
    packed, r = put(packed, wcomb, r)
    packed, r = put(packed, b1.reshape(1, H4), r)
    packed, r = put(packed, params["fc_w"].reshape(1, H), r)
    packed, r = put(packed, params["fc_b"].reshape(1, 1), r)

    # ---- Batch-tile grid: parallel axis (megacore / v7x 2-TC sharding + pipelining at scale) ----
    BT = 256 if (B > 256 and B % 256 == 0) else B
    grid = (B // BT,)

    kernel = functools.partial(cnn_lstm_kernel, F=F, K=K, H=H)

    flops = (2 * B * T_out * KC * F                 # conv im2col matmul
             + 2 * B * Tp * F * H4                  # hoisted layer-0 input projection
             + Tp * 2 * B * (2 * H) * H8            # fused per-step recurrent matmul
             + 2 * B * H)                           # final fc
    transcendentals = Tp * 2 * 5 * B * H            # (3 sigmoid + 2 tanh) * H per cell per step
    bytes_accessed = 4 * (B * T * Cin + R * W + B)

    out_row = pl.pallas_call(
        kernel,
        out_shape=jax.ShapeDtypeStruct((1, B), jnp.float32),
        grid=grid,
        in_specs=[pl.BlockSpec((BT, T, Cin), lambda i: (i, 0, 0)),
                  pl.BlockSpec((R, W), lambda i: (0, 0))],
        out_specs=pl.BlockSpec((1, BT), lambda i: (0, i)),
        scratch_shapes=[pltpu.VMEM((BT, T + 2, Cin), jnp.float32),
                        pltpu.VMEM((BT, 2 * H), jnp.float32)],
        compiler_params=pltpu.CompilerParams(
            dimension_semantics=("parallel",),
            # v7x: keep <= ~48 MiB headroom (64 MiB physical); v5e/v6e can go higher with
            # larger batch tiles.
            vmem_limit_bytes=48 * 1024 * 1024),
        cost_estimate=pl.CostEstimate(flops=flops, transcendentals=transcendentals,
                                      bytes_accessed=bytes_accessed),
    )(x, packed)
    return out_row.reshape(B, 1)


# ------------------------------------ Reference (pure JAX) ------------------------------------
def cnn_lstm_reference(x, params):
    B, T, Cin = x.shape
    F = params["conv_w"].shape[0]
    K = params["conv_w"].shape[2]
    H = params["w_hh0"].shape[1]
    T_out = T + 2 - K + 1
    Tp = T_out // 2
    xp = jnp.pad(x, ((0, 0), (1, 1), (0, 0)))
    y = jnp.zeros((B, T_out, F), jnp.float32)
    for k in range(K):
        y = y + jnp.einsum("btc,fc->btf", xp[:, k:k + T_out, :], params["conv_w"][:, :, k])
    y = jnp.maximum(y + params["conv_b"], 0.0)
    y = y[:, :2 * Tp, :].reshape(B, Tp, 2, F).max(axis=2)

    def run_layer(seq, wih, whh, bih, bhh):
        h = jnp.zeros((B, H), jnp.float32)
        c = jnp.zeros((B, H), jnp.float32)
        outs = []
        for t in range(seq.shape[1]):
            g = seq[:, t, :] @ wih.T + bih + h @ whh.T + bhh
            i = jax.nn.sigmoid(g[:, 0:H]); f = jax.nn.sigmoid(g[:, H:2 * H])
            gg = jnp.tanh(g[:, 2 * H:3 * H]); o = jax.nn.sigmoid(g[:, 3 * H:4 * H])
            c = f * c + i * gg
            h = o * jnp.tanh(c)
            outs.append(h)
        return jnp.stack(outs, axis=1), h

    seq0, _ = run_layer(y, params["w_ih0"], params["w_hh0"], params["b_ih0"], params["b_hh0"])
    _, h1 = run_layer(seq0, params["w_ih1"], params["w_hh1"], params["b_ih1"], params["b_hh1"])
    return h1 @ params["fc_w"].T + params["fc_b"]


# -------------------------------------------- Main --------------------------------------------
if __name__ == "__main__":
    B, T, INPUT_SIZE = 2, 8, 4
    NUM_FILTERS, KERNEL_SIZE, H = 8, 3, 16

    key = jax.random.PRNGKey(0)
    keys = jax.random.split(key, 16)

    def u(k, shape, bound):
        return jax.random.uniform(k, shape, jnp.float32, minval=-bound, maxval=bound)

    kc = 1.0 / jnp.sqrt(INPUT_SIZE * KERNEL_SIZE)
    kl = 1.0 / jnp.sqrt(H)
    params = {
        "conv_w": u(keys[0], (NUM_FILTERS, INPUT_SIZE, KERNEL_SIZE), kc),
        "conv_b": u(keys[1], (NUM_FILTERS,), kc),
        "w_ih0": u(keys[2], (4 * H, NUM_FILTERS), kl),
        "w_hh0": u(keys[3], (4 * H, H), kl),
        "b_ih0": u(keys[4], (4 * H,), kl),
        "b_hh0": u(keys[5], (4 * H,), kl),
        "w_ih1": u(keys[6], (4 * H, H), kl),
        "w_hh1": u(keys[7], (4 * H, H), kl),
        "b_ih1": u(keys[8], (4 * H,), kl),
        "b_hh1": u(keys[9], (4 * H,), kl),
        "fc_w": u(keys[10], (1, H), kl),
        "fc_b": u(keys[11], (1,), kl),
    }

    x = jax.random.normal(keys[12], (B, T, INPUT_SIZE), jnp.float32)

    out = cnn_lstm_forward(x, params)
    out = jax.block_until_ready(out)

    ref = cnn_lstm_reference(x, params)
    assert out.shape == (B, 1)
    assert jnp.allclose(out, ref, atol=2e-3, rtol=2e-3), (out, ref)

    print("KERNEL_OK")
</pallas_src>

<mosaic_0001>
module attributes {stable_mosaic.version = 11 : i64} {
  func.func @cnn_lstm_kernel(%arg0: i32, %arg1: memref<2x8x4xf32, #tpu.memory_space<vmem>>, %arg2: memref<57x128xf32, #tpu.memory_space<vmem>>, %arg3: memref<1x2xf32, #tpu.memory_space<vmem>>, %arg4: memref<2x10x4xf32, #tpu.memory_space<vmem>>, %arg5: memref<2x32xf32, #tpu.memory_space<vmem>>) attributes {dimension_semantics = [#tpu.dimension_semantics<parallel>], iteration_bounds = array<i64: 1>, scalar_prefetch = 0 : i64, scratch_operands = 2 : i64, tpu.core_type = #tpu.core_type<tc>, window_params = [{transform_indices = @transform_0, window_bounds = array<i64: 2, 8, 4>}, {pipeline_mode = #tpu.pipeline_mode<synchronous>, transform_indices = @transform_1, window_bounds = array<i64: 57, 128>}, {transform_indices = @transform_2, window_bounds = array<i64: 1, 2>}]} {
    %c0 = arith.constant 0 : index
    %c0_0 = arith.constant 0 : index
    %0 = vector.load %arg2[%c0, %c0_0] : memref<57x128xf32, #tpu.memory_space<vmem>>, vector<12x8xf32>
    %c12 = arith.constant 12 : index
    %c0_1 = arith.constant 0 : index
    %1 = vector.load %arg2[%c12, %c0_1] : memref<57x128xf32, #tpu.memory_space<vmem>>, vector<1x8xf32>
    %c13 = arith.constant 13 : index
    %c0_2 = arith.constant 0 : index
    %2 = vector.load %arg2[%c13, %c0_2] : memref<57x128xf32, #tpu.memory_space<vmem>>, vector<8x64xf32>
    %c21 = arith.constant 21 : index
    %c0_3 = arith.constant 0 : index
    %3 = vector.load %arg2[%c21, %c0_3] : memref<57x128xf32, #tpu.memory_space<vmem>>, vector<1x64xf32>
    %c22 = arith.constant 22 : index
    %c0_4 = arith.constant 0 : index
    %4 = vector.load %arg2[%c22, %c0_4] : memref<57x128xf32, #tpu.memory_space<vmem>>, vector<32x128xf32>
    %c54 = arith.constant 54 : index
    %c0_5 = arith.constant 0 : index
    %5 = vector.load %arg2[%c54, %c0_5] : memref<57x128xf32, #tpu.memory_space<vmem>>, vector<1x64xf32>
    %c55 = arith.constant 55 : index
    %c0_6 = arith.constant 0 : index
    %6 = vector.load %arg2[%c55, %c0_6] : memref<57x128xf32, #tpu.memory_space<vmem>>, vector<1x16xf32>
    %c56 = arith.constant 56 : index
    %c0_7 = arith.constant 0 : index
    %7 = vector.load %arg2[%c56, %c0_7] : memref<57x128xf32, #tpu.memory_space<vmem>>, vector<1x1xf32>
    %cst = arith.constant 0.000000e+00 : f32
    %8 = vector.broadcast %cst : f32 to vector<2x10x4xf32>
    %c0_8 = arith.constant 0 : index
    %c0_9 = arith.constant 0 : index
    %c0_10 = arith.constant 0 : index
    %9 = vector.load %arg4[%c0_8, %c0_9, %c0_10] : memref<2x10x4xf32, #tpu.memory_space<vmem>>, vector<2x10x4xf32>
    tpu.vector_store %arg4[%c0_8, %c0_9, %c0_10], %8 {strides = array<i32>} : memref<2x10x4xf32, #tpu.memory_space<vmem>>, vector<2x10x4xf32>,
    %c0_11 = arith.constant 0 : index
    %c0_12 = arith.constant 0 : index
    %c0_13 = arith.constant 0 : index
    %10 = vector.load %arg1[%c0_11, %c0_12, %c0_13] : memref<2x8x4xf32, #tpu.memory_space<vmem>>, vector<2x8x4xf32>
    %c0_14 = arith.constant 0 : index
    %c1 = arith.constant 1 : index
    %c0_15 = arith.constant 0 : index
    %11 = vector.load %arg4[%c0_14, %c1, %c0_15] : memref<2x10x4xf32, #tpu.memory_space<vmem>>, vector<2x8x4xf32>
    tpu.vector_store %arg4[%c0_14, %c1, %c0_15], %10 {strides = array<i32>} : memref<2x10x4xf32, #tpu.memory_space<vmem>>, vector<2x8x4xf32>,
    %c0_16 = arith.constant 0 : index
    %c0_17 = arith.constant 0 : index
    %c0_18 = arith.constant 0 : index
    %12 = vector.load %arg4[%c0_16, %c0_17, %c0_18] : memref<2x10x4xf32, #tpu.memory_space<vmem>>, vector<2x10x4xf32>
    %13 = vector.extract_strided_slice %12 {offsets = [0, 0, 0], sizes = [2, 8, 4], strides = [1, 1, 1]} : vector<2x10x4xf32> to vector<2x8x4xf32>
    %14 = vector.extract_strided_slice %12 {offsets = [0, 1, 0], sizes = [2, 8, 4], strides = [1, 1, 1]} : vector<2x10x4xf32> to vector<2x8x4xf32>
    %15 = vector.extract_strided_slice %12 {offsets = [0, 2, 0], sizes = [2, 8, 4], strides = [1, 1, 1]} : vector<2x10x4xf32> to vector<2x8x4xf32>
    %16 = tpu.concatenate %13, %14, %15 in 2 : vector<2x8x4xf32>, vector<2x8x4xf32>, vector<2x8x4xf32> -> vector<2x8x12xf32>
    %17 = vector.shape_cast %16 : vector<2x8x12xf32> to vector<16x12xf32>
    %cst_19 = arith.constant dense<0.000000e+00> : vector<16x8xf32>
    %18 = tpu.matmul %17, %0, %cst_19 {dimension_numbers = #tpu.dot_dimension_numbers<[1], [0], [0], [1], [0, 0, 1, 1], [], []>} : vector<16x12xf32>, vector<12x8xf32>, vector<16x8xf32> -> vector<16x8xf32>
    %19 = vector.broadcast %1 : vector<1x8xf32> to vector<16x8xf32>
    %20 = arith.addf %18, %19 : vector<16x8xf32>
    %cst_20 = arith.constant 0.000000e+00 : f32
    %21 = vector.broadcast %cst_20 : f32 to vector<16x8xf32>
    %22 = arith.maximumf %20, %21 : vector<16x8xf32>
    %23 = vector.shape_cast %22 : vector<16x8xf32> to vector<2x8x8xf32>
    %24 = vector.shape_cast %23 : vector<2x8x8xf32> to vector<2x4x2x8xf32>
    %25 = vector.extract_strided_slice %24 {offsets = [0, 0, 0, 0], sizes = [2, 4, 1, 8], strides = [1, 1, 1, 1]} : vector<2x4x2x8xf32> to vector<2x4x1x8xf32>
    %26 = vector.shape_cast %25 : vector<2x4x1x8xf32> to vector<2x4x8xf32>
    %27 = vector.extract_strided_slice %24 {offsets = [0, 0, 1, 0], sizes = [2, 4, 1, 8], strides = [1, 1, 1, 1]} : vector<2x4x2x8xf32> to vector<2x4x1x8xf32>
    %28 = vector.shape_cast %27 : vector<2x4x1x8xf32> to vector<2x4x8xf32>
    %29 = arith.maximumf %26, %28 : vector<2x4x8xf32>
    %30 = vector.shape_cast %29 : vector<2x4x8xf32> to vector<8x8xf32>
    %cst_21 = arith.constant dense<0.000000e+00> : vector<8x64xf32>
    %31 = tpu.matmul %30, %2, %cst_21 {dimension_numbers = #tpu.dot_dimension_numbers<[1], [0], [0], [1], [0, 0, 1, 1], [], []>} : vector<8x8xf32>, vector<8x64xf32>, vector<8x64xf32> -> vector<8x64xf32>
    %32 = vector.broadcast %3 : vector<1x64xf32> to vector<8x64xf32>
    %33 = arith.addf %31, %32 : vector<8x64xf32>
    %34 = vector.shape_cast %33 : vector<8x64xf32> to vector<2x4x64xf32>
    %cst_22 = arith.constant 0.000000e+00 : f32
    %35 = vector.broadcast %cst_22 : f32 to vector<2x16xf32>
    %cst_23 = arith.constant 0.000000e+00 : f32
    %36 = vector.broadcast %cst_23 : f32 to vector<2x32xf32>
    %c0_24 = arith.constant 0 : index
    %c0_25 = arith.constant 0 : index
    %37 = vector.load %arg5[%c0_24, %c0_25] : memref<2x32xf32, #tpu.memory_space<vmem>>, vector<2x32xf32>
    tpu.vector_store %arg5[%c0_24, %c0_25], %36 {strides = array<i32>} : memref<2x32xf32, #tpu.memory_space<vmem>>, vector<2x32xf32>,
    %38 = vector.extract_strided_slice %34 {offsets = [0, 0, 0], sizes = [2, 1, 64], strides = [1, 1, 1]} : vector<2x4x64xf32> to vector<2x1x64xf32>
    %39 = vector.shape_cast %38 : vector<2x1x64xf32> to vector<2x64xf32>
    %40 = vector.extract_strided_slice %39 {offsets = [0, 0], sizes = [2, 48], strides = [1, 1]} : vector<2x64xf32> to vector<2x48xf32>
    %41 = arith.negf %40 : vector<2x48xf32>
    %42 = math.exp %41 : vector<2x48xf32>
    %cst_26 = arith.constant 1.000000e+00 : f32
    %43 = vector.broadcast %cst_26 : f32 to vector<2x48xf32>
    %44 = arith.addf %43, %42 : vector<2x48xf32>
    %45 = arith.divf %43, %44 : vector<2x48xf32>
    %46 = vector.extract_strided_slice %39 {offsets = [0, 48], sizes = [2, 16], strides = [1, 1]} : vector<2x64xf32> to vector<2x16xf32>
    %47 = math.tanh %46 : vector<2x16xf32>
    %48 = vector.extract_strided_slice %45 {offsets = [0, 0], sizes = [2, 16], strides = [1, 1]} : vector<2x48xf32> to vector<2x16xf32>
    %49 = vector.extract_strided_slice %45 {offsets = [0, 16], sizes = [2, 16], strides = [1, 1]} : vector<2x48xf32> to vector<2x16xf32>
    %50 = vector.extract_strided_slice %45 {offsets = [0, 32], sizes = [2, 16], strides = [1, 1]} : vector<2x48xf32> to vector<2x16xf32>
    %51 = arith.mulf %49, %35 : vector<2x16xf32>
    %52 = arith.mulf %48, %47 : vector<2x16xf32>
    %53 = arith.addf %51, %52 : vector<2x16xf32>
    %54 = math.tanh %53 : vector<2x16xf32>
    %55 = arith.mulf %50, %54 : vector<2x16xf32>
    %c0_27 = arith.constant 0 : index
    %c0_28 = arith.constant 0 : index
    %56 = vector.load %arg5[%c0_27, %c0_28] : memref<2x32xf32, #tpu.memory_space<vmem>>, vector<2x16xf32>
    tpu.vector_store %arg5[%c0_27, %c0_28], %55 {strides = array<i32>} : memref<2x32xf32, #tpu.memory_space<vmem>>, vector<2x16xf32>,
    %c0_29 = arith.constant 0 : index
    %c0_30 = arith.constant 0 : index
    %57 = vector.load %arg5[%c0_29, %c0_30] : memref<2x32xf32, #tpu.memory_space<vmem>>, vector<2x32xf32>
    %cst_31 = arith.constant dense<0.000000e+00> : vector<2x128xf32>
    %58 = tpu.matmul %57, %4, %cst_31 {dimension_numbers = #tpu.dot_dimension_numbers<[1], [0], [0], [1], [0, 0, 1, 1], [], []>} : vector<2x32xf32>, vector<32x128xf32>, vector<2x128xf32> -> vector<2x128xf32>
    %59 = vector.extract_strided_slice %58 {offsets = [0, 64], sizes = [2, 64], strides = [1, 1]} : vector<2x128xf32> to vector<2x64xf32>
    %60 = vector.broadcast %5 : vector<1x64xf32> to vector<2x64xf32>
    %61 = arith.addf %59, %60 : vector<2x64xf32>
    %62 = vector.extract_strided_slice %61 {offsets = [0, 0], sizes = [2, 48], strides = [1, 1]} : vector<2x64xf32> to vector<2x48xf32>
    %63 = arith.negf %62 : vector<2x48xf32>
    %64 = math.exp %63 : vector<2x48xf32>
    %cst_32 = arith.constant 1.000000e+00 : f32
    %65 = vector.broadcast %cst_32 : f32 to vector<2x48xf32>
    %66 = arith.addf %65, %64 : vector<2x48xf32>
    %67 = arith.divf %65, %66 : vector<2x48xf32>
    %68 = vector.extract_strided_slice %61 {offsets = [0, 48], sizes = [2, 16], strides = [1, 1]} : vector<2x64xf32> to vector<2x16xf32>
    %69 = math.tanh %68 : vector<2x16xf32>
    %70 = vector.extract_strided_slice %67 {offsets = [0, 0], sizes = [2, 16], strides = [1, 1]} : vector<2x48xf32> to vector<2x16xf32>
    %71 = vector.extract_strided_slice %67 {offsets = [0, 16], sizes = [2, 16], strides = [1, 1]} : vector<2x48xf32> to vector<2x16xf32>
    %72 = vector.extract_strided_slice %67 {offsets = [0, 32], sizes = [2, 16], strides = [1, 1]} : vector<2x48xf32> to vector<2x16xf32>
    %73 = arith.mulf %71, %35 : vector<2x16xf32>
    %74 = arith.mulf %70, %69 : vector<2x16xf32>
    %75 = arith.addf %73, %74 : vector<2x16xf32>
    %76 = math.tanh %75 : vector<2x16xf32>
    %77 = arith.mulf %72, %76 : vector<2x16xf32>
    %c0_33 = arith.constant 0 : index
    %c16 = arith.constant 16 : index
    %78 = vector.load %arg5[%c0_33, %c16] : memref<2x32xf32, #tpu.memory_space<vmem>>, vector<2x16xf32>
    tpu.vector_store %arg5[%c0_33, %c16], %77 {strides = array<i32>} : memref<2x32xf32, #tpu.memory_space<vmem>>, vector<2x16xf32>,
    %79 = vector.extract_strided_slice %34 {offsets = [0, 1, 0], sizes = [2, 1, 64], strides = [1, 1, 1]} : vector<2x4x64xf32> to vector<2x1x64xf32>
    %80 = vector.shape_cast %79 : vector<2x1x64xf32> to vector<2x64xf32>
    %81 = vector.extract_strided_slice %58 {offsets = [0, 0], sizes = [2, 64], strides = [1, 1]} : vector<2x128xf32> to vector<2x64xf32>
    %82 = arith.addf %80, %81 : vector<2x64xf32>
    %83 = vector.extract_strided_slice %82 {offsets = [0, 0], sizes = [2, 48], strides = [1, 1]} : vector<2x64xf32> to vector<2x48xf32>
    %84 = arith.negf %83 : vector<2x48xf32>
    %85 = math.exp %84 : vector<2x48xf32>
    %cst_34 = arith.constant 1.000000e+00 : f32
    %86 = vector.broadcast %cst_34 : f32 to vector<2x48xf32>
    %87 = arith.addf %86, %85 : vector<2x48xf32>
    %88 = arith.divf %86, %87 : vector<2x48xf32>
    %89 = vector.extract_strided_slice %82 {offsets = [0, 48], sizes = [2, 16], strides = [1, 1]} : vector<2x64xf32> to vector<2x16xf32>
    %90 = math.tanh %89 : vector<2x16xf32>
    %91 = vector.extract_strided_slice %88 {offsets = [0, 0], sizes = [2, 16], strides = [1, 1]} : vector<2x48xf32> to vector<2x16xf32>
    %92 = vector.extract_strided_slice %88 {offsets = [0, 16], sizes = [2, 16], strides = [1, 1]} : vector<2x48xf32> to vector<2x16xf32>
    %93 = vector.extract_strided_slice %88 {offsets = [0, 32], sizes = [2, 16], strides = [1, 1]} : vector<2x48xf32> to vector<2x16xf32>
    %94 = arith.mulf %92, %53 : vector<2x16xf32>
    %95 = arith.mulf %91, %90 : vector<2x16xf32>
    %96 = arith.addf %94, %95 : vector<2x16xf32>
    %97 = math.tanh %96 : vector<2x16xf32>
    %98 = arith.mulf %93, %97 : vector<2x16xf32>
    %c0_35 = arith.constant 0 : index
    %c0_36 = arith.constant 0 : index
    %99 = vector.load %arg5[%c0_35, %c0_36] : memref<2x32xf32, #tpu.memory_space<vmem>>, vector<2x16xf32>
    tpu.vector_store %arg5[%c0_35, %c0_36], %98 {strides = array<i32>} : memref<2x32xf32, #tpu.memory_space<vmem>>, vector<2x16xf32>,
    %c0_37 = arith.constant 0 : index
    %c0_38 = arith.constant 0 : index
    %100 = vector.load %arg5[%c0_37, %c0_38] : memref<2x32xf32, #tpu.memory_space<vmem>>, vector<2x32xf32>
    %cst_39 = arith.constant dense<0.000000e+00> : vector<2x128xf32>
    %101 = tpu.matmul %100, %4, %cst_39 {dimension_numbers = #tpu.dot_dimension_numbers<[1], [0], [0], [1], [0, 0, 1, 1], [], []>} : vector<2x32xf32>, vector<32x128xf32>, vector<2x128xf32> -> vector<2x128xf32>
    %102 = vector.extract_strided_slice %101 {offsets = [0, 64], sizes = [2, 64], strides = [1, 1]} : vector<2x128xf32> to vector<2x64xf32>
    %103 = vector.broadcast %5 : vector<1x64xf32> to vector<2x64xf32>
    %104 = arith.addf %102, %103 : vector<2x64xf32>
    %105 = vector.extract_strided_slice %104 {offsets = [0, 0], sizes = [2, 48], strides = [1, 1]} : vector<2x64xf32> to vector<2x48xf32>
    %106 = arith.negf %105 : vector<2x48xf32>
    %107 = math.exp %106 : vector<2x48xf32>
    %cst_40 = arith.constant 1.000000e+00 : f32
    %108 = vector.broadcast %cst_40 : f32 to vector<2x48xf32>
    %109 = arith.addf %108, %107 : vector<2x48xf32>
    %110 = arith.divf %108, %109 : vector<2x48xf32>
    %111 = vector.extract_strided_slice %104 {offsets = [0, 48], sizes = [2, 16], strides = [1, 1]} : vector<2x64xf32> to vector<2x16xf32>
    %112 = math.tanh %111 : vector<2x16xf32>
    %113 = vector.extract_strided_slice %110 {offsets = [0, 0], sizes = [2, 16], strides = [1, 1]} : vector<2x48xf32> to vector<2x16xf32>
    %114 = vector.extract_strided_slice %110 {offsets = [0, 16], sizes = [2, 16], strides = [1, 1]} : vector<2x48xf32> to vector<2x16xf32>
    %115 = vector.extract_strided_slice %110 {offsets = [0, 32], sizes = [2, 16], strides = [1, 1]} : vector<2x48xf32> to vector<2x16xf32>
    %116 = arith.mulf %114, %75 : vector<2x16xf32>
    %117 = arith.mulf %113, %112 : vector<2x16xf32>
    %118 = arith.addf %116, %117 : vector<2x16xf32>
    %119 = math.tanh %118 : vector<2x16xf32>
    %120 = arith.mulf %115, %119 : vector<2x16xf32>
    %c0_41 = arith.constant 0 : index
    %c16_42 = arith.constant 16 : index
    %121 = vector.load %arg5[%c0_41, %c16_42] : memref<2x32xf32, #tpu.memory_space<vmem>>, vector<2x16xf32>
    tpu.vector_store %arg5[%c0_41, %c16_42], %120 {strides = array<i32>} : memref<2x32xf32, #tpu.memory_space<vmem>>, vector<2x16xf32>,
    %122 = vector.extract_strided_slice %34 {offsets = [0, 2, 0], sizes = [2, 1, 64], strides = [1, 1, 1]} : vector<2x4x64xf32> to vector<2x1x64xf32>
    %123 = vector.shape_cast %122 : vector<2x1x64xf32> to vector<2x64xf32>
    %124 = vector.extract_strided_slice %101 {offsets = [0, 0], sizes = [2, 64], strides = [1, 1]} : vector<2x128xf32> to vector<2x64xf32>
    %125 = arith.addf %123, %124 : vector<2x64xf32>
    %126 = vector.extract_strided_slice %125 {offsets = [0, 0], sizes = [2, 48], strides = [1, 1]} : vector<2x64xf32> to vector<2x48xf32>
    %127 = arith.negf %126 : vector<2x48xf32>
    %128 = math.exp %127 : vector<2x48xf32>
    %cst_43 = arith.constant 1.000000e+00 : f32
    %129 = vector.broadcast %cst_43 : f32 to vector<2x48xf32>
    %130 = arith.addf %129, %128 : vector<2x48xf32>
    %131 = arith.divf %129, %130 : vector<2x48xf32>
    %132 = vector.extract_strided_slice %125 {offsets = [0, 48], sizes = [2, 16], strides = [1, 1]} : vector<2x64xf32> to vector<2x16xf32>
    %133 = math.tanh %132 : vector<2x16xf32>
    %134 = vector.extract_strided_slice %131 {offsets = [0, 0], sizes = [2, 16], strides = [1, 1]} : vector<2x48xf32> to vector<2x16xf32>
    %135 = vector.extract_strided_slice %131 {offsets = [0, 16], sizes = [2, 16], strides = [1, 1]} : vector<2x48xf32> to vector<2x16xf32>
    %136 = vector.extract_strided_slice %131 {offsets = [0, 32], sizes = [2, 16], strides = [1, 1]} : vector<2x48xf32> to vector<2x16xf32>
    %137 = arith.mulf %135, %96 : vector<2x16xf32>
    %138 = arith.mulf %134, %133 : vector<2x16xf32>
    %139 = arith.addf %137, %138 : vector<2x16xf32>
    %140 = math.tanh %139 : vector<2x16xf32>
    %141 = arith.mulf %136, %140 : vector<2x16xf32>
    %c0_44 = arith.constant 0 : index
    %c0_45 = arith.constant 0 : index
    %142 = vector.load %arg5[%c0_44, %c0_45] : memref<2x32xf32, #tpu.memory_space<vmem>>, vector<2x16xf32>
    tpu.vector_store %arg5[%c0_44, %c0_45], %141 {strides = array<i32>} : memref<2x32xf32, #tpu.memory_space<vmem>>, vector<2x16xf32>,
    %c0_46 = arith.constant 0 : index
    %c0_47 = arith.constant 0 : index
    %143 = vector.load %arg5[%c0_46, %c0_47] : memref<2x32xf32, #tpu.memory_space<vmem>>, vector<2x32xf32>
    %cst_48 = arith.constant dense<0.000000e+00> : vector<2x128xf32>
    %144 = tpu.matmul %143, %4, %cst_48 {dimension_numbers = #tpu.dot_dimension_numbers<[1], [0], [0], [1], [0, 0, 1, 1], [], []>} : vector<2x32xf32>, vector<32x128xf32>, vector<2x128xf32> -> vector<2x128xf32>
    %145 = vector.extract_strided_slice %144 {offsets = [0, 64], sizes = [2, 64], strides = [1, 1]} : vector<2x128xf32> to vector<2x64xf32>
    %146 = vector.broadcast %5 : vector<1x64xf32> to vector<2x64xf32>
    %147 = arith.addf %145, %146 : vector<2x64xf32>
    %148 = vector.extract_strided_slice %147 {offsets = [0, 0], sizes = [2, 48], strides = [1, 1]} : vector<2x64xf32> to vector<2x48xf32>
    %149 = arith.negf %148 : vector<2x48xf32>
    %150 = math.exp %149 : vector<2x48xf32>
    %cst_49 = arith.constant 1.000000e+00 : f32
    %151 = vector.broadcast %cst_49 : f32 to vector<2x48xf32>
    %152 = arith.addf %151, %150 : vector<2x48xf32>
    %153 = arith.divf %151, %152 : vector<2x48xf32>
    %154 = vector.extract_strided_slice %147 {offsets = [0, 48], sizes = [2, 16], strides = [1, 1]} : vector<2x64xf32> to vector<2x16xf32>
    %155 = math.tanh %154 : vector<2x16xf32>
    %156 = vector.extract_strided_slice %153 {offsets = [0, 0], sizes = [2, 16], strides = [1, 1]} : vector<2x48xf32> to vector<2x16xf32>
    %157 = vector.extract_strided_slice %153 {offsets = [0, 16], sizes = [2, 16], strides = [1, 1]} : vector<2x48xf32> to vector<2x16xf32>
    %158 = vector.extract_strided_slice %153 {offsets = [0, 32], sizes = [2, 16], strides = [1, 1]} : vector<2x48xf32> to vector<2x16xf32>
    %159 = arith.mulf %157, %118 : vector<2x16xf32>
    %160 = arith.mulf %156, %155 : vector<2x16xf32>
    %161 = arith.addf %159, %160 : vector<2x16xf32>
    %162 = math.tanh %161 : vector<2x16xf32>
    %163 = arith.mulf %158, %162 : vector<2x16xf32>
    %c0_50 = arith.constant 0 : index
    %c16_51 = arith.constant 16 : index
    %164 = vector.load %arg5[%c0_50, %c16_51] : memref<2x32xf32, #tpu.memory_space<vmem>>, vector<2x16xf32>
    tpu.vector_store %arg5[%c0_50, %c16_51], %163 {strides = array<i32>} : memref<2x32xf32, #tpu.memory_space<vmem>>, vector<2x16xf32>,
    %165 = vector.extract_strided_slice %34 {offsets = [0, 3, 0], sizes = [2, 1, 64], strides = [1, 1, 1]} : vector<2x4x64xf32> to vector<2x1x64xf32>
    %166 = vector.shape_cast %165 : vector<2x1x64xf32> to vector<2x64xf32>
    %167 = vector.extract_strided_slice %144 {offsets = [0, 0], sizes = [2, 64], strides = [1, 1]} : vector<2x128xf32> to vector<2x64xf32>
    %168 = arith.addf %166, %167 : vector<2x64xf32>
    %169 = vector.extract_strided_slice %168 {offsets = [0, 0], sizes = [2, 48], strides = [1, 1]} : vector<2x64xf32> to vector<2x48xf32>
    %170 = arith.negf %169 : vector<2x48xf32>
    %171 = math.exp %170 : vector<2x48xf32>
    %cst_52 = arith.constant 1.000000e+00 : f32
    %172 = vector.broadcast %cst_52 : f32 to vector<2x48xf32>
    %173 = arith.addf %172, %171 : vector<2x48xf32>
    %174 = arith.divf %172, %173 : vector<2x48xf32>
    %175 = vector.extract_strided_slice %168 {offsets = [0, 48], sizes = [2, 16], strides = [1, 1]} : vector<2x64xf32> to vector<2x16xf32>
    %176 = math.tanh %175 : vector<2x16xf32>
    %177 = vector.extract_strided_slice %174 {offsets = [0, 0], sizes = [2, 16], strides = [1, 1]} : vector<2x48xf32> to vector<2x16xf32>
    %178 = vector.extract_strided_slice %174 {offsets = [0, 16], sizes = [2, 16], strides = [1, 1]} : vector<2x48xf32> to vector<2x16xf32>
    %179 = vector.extract_strided_slice %174 {offsets = [0, 32], sizes = [2, 16], strides = [1, 1]} : vector<2x48xf32> to vector<2x16xf32>
    %180 = arith.mulf %178, %139 : vector<2x16xf32>
    %181 = arith.mulf %177, %176 : vector<2x16xf32>
    %182 = arith.addf %180, %181 : vector<2x16xf32>
    %183 = math.tanh %182 : vector<2x16xf32>
    %184 = arith.mulf %179, %183 : vector<2x16xf32>
    %c0_53 = arith.constant 0 : index
    %c0_54 = arith.constant 0 : index
    %185 = vector.load %arg5[%c0_53, %c0_54] : memref<2x32xf32, #tpu.memory_space<vmem>>, vector<2x16xf32>
    tpu.vector_store %arg5[%c0_53, %c0_54], %184 {strides = array<i32>} : memref<2x32xf32, #tpu.memory_space<vmem>>, vector<2x16xf32>,
    %c0_55 = arith.constant 0 : index
    %c0_56 = arith.constant 0 : index
    %186 = vector.load %arg5[%c0_55, %c0_56] : memref<2x32xf32, #tpu.memory_space<vmem>>, vector<2x32xf32>
    %cst_57 = arith.constant dense<0.000000e+00> : vector<2x128xf32>
    %187 = tpu.matmul %186, %4, %cst_57 {dimension_numbers = #tpu.dot_dimension_numbers<[1], [0], [0], [1], [0, 0, 1, 1], [], []>} : vector<2x32xf32>, vector<32x128xf32>, vector<2x128xf32> -> vector<2x128xf32>
    %188 = vector.extract_strided_slice %187 {offsets = [0, 64], sizes = [2, 64], strides = [1, 1]} : vector<2x128xf32> to vector<2x64xf32>
    %189 = vector.broadcast %5 : vector<1x64xf32> to vector<2x64xf32>
    %190 = arith.addf %188, %189 : vector<2x64xf32>
    %191 = vector.extract_strided_slice %190 {offsets = [0, 0], sizes = [2, 48], strides = [1, 1]} : vector<2x64xf32> to vector<2x48xf32>
    %192 = arith.negf %191 : vector<2x48xf32>
    %193 = math.exp %192 : vector<2x48xf32>
    %cst_58 = arith.constant 1.000000e+00 : f32
    %194 = vector.broadcast %cst_58 : f32 to vector<2x48xf32>
    %195 = arith.addf %194, %193 : vector<2x48xf32>
    %196 = arith.divf %194, %195 : vector<2x48xf32>
    %197 = vector.extract_strided_slice %190 {offsets = [0, 48], sizes = [2, 16], strides = [1, 1]} : vector<2x64xf32> to vector<2x16xf32>
    %198 = math.tanh %197 : vector<2x16xf32>
    %199 = vector.extract_strided_slice %196 {offsets = [0, 0], sizes = [2, 16], strides = [1, 1]} : vector<2x48xf32> to vector<2x16xf32>
    %200 = vector.extract_strided_slice %196 {offsets = [0, 16], sizes = [2, 16], strides = [1, 1]} : vector<2x48xf32> to vector<2x16xf32>
    %201 = vector.extract_strided_slice %196 {offsets = [0, 32], sizes = [2, 16], strides = [1, 1]} : vector<2x48xf32> to vector<2x16xf32>
    %202 = arith.mulf %200, %161 : vector<2x16xf32>
    %203 = arith.mulf %199, %198 : vector<2x16xf32>
    %204 = arith.addf %202, %203 : vector<2x16xf32>
    %205 = math.tanh %204 : vector<2x16xf32>
    %206 = arith.mulf %201, %205 : vector<2x16xf32>
    %c0_59 = arith.constant 0 : index
    %c16_60 = arith.constant 16 : index
    %207 = vector.load %arg5[%c0_59, %c16_60] : memref<2x32xf32, #tpu.memory_space<vmem>>, vector<2x16xf32>
    tpu.vector_store %arg5[%c0_59, %c16_60], %206 {strides = array<i32>} : memref<2x32xf32, #tpu.memory_space<vmem>>, vector<2x16xf32>,
    "tpu.trace_start"() <{level = 10 : i32, message = "oh,bh->ob"}> : () -> ()
    %cst_61 = arith.constant dense<0.000000e+00> : vector<1x2xf32>
    %208 = tpu.matmul %6, %206, %cst_61 {dimension_numbers = #tpu.dot_dimension_numbers<[1], [1], [0], [0], [0, 0, 1, 0], [], []>} : vector<1x16xf32>, vector<2x16xf32>, vector<1x2xf32> -> vector<1x2xf32>
    "tpu.trace_stop"() : () -> ()
    %209 = vector.broadcast %7 : vector<1x1xf32> to vector<1x2xf32>
    %210 = arith.addf %208, %209 : vector<1x2xf32>
    %c0_62 = arith.constant 0 : index
    %c0_63 = arith.constant 0 : index
    %211 = vector.load %arg3[%c0_62, %c0_63] : memref<1x2xf32, #tpu.memory_space<vmem>>, vector<1x2xf32>
    tpu.vector_store %arg3[%c0_62, %c0_63], %210 {strides = array<i32>} : memref<1x2xf32, #tpu.memory_space<vmem>>, vector<1x2xf32>,
    return
  }
  func.func @transform_0(%arg0: i32) -> (i32, i32, i32) {
    %c0_i32 = arith.constant 0 : i32
    %c0_i32_0 = arith.constant 0 : i32
    %c0_i32_1 = arith.constant 0 : i32
    return %arg0, %c0_i32, %c0_i32_0 : i32, i32, i32
  }
  func.func @transform_1(%arg0: i32) -> (i32, i32) {
    %c0_i32 = arith.constant 0 : i32
    %c0_i32_0 = arith.constant 0 : i32
    %c0_i32_1 = arith.constant 0 : i32
    return %c0_i32, %c0_i32_0 : i32, i32
  }
  func.func @transform_2(%arg0: i32) -> (i32, i32) {
    %c0_i32 = arith.constant 0 : i32
    %c0_i32_0 = arith.constant 0 : i32
    return %c0_i32, %arg0 : i32, i32
  }
}

</mosaic_0001>

<llo_original>
// kernel: tpu_custom_call.1
$region0: #{tpu_custom_call.1}
  #allocation0 [shape = 'u32[]', space=smem, size = 0x4, offset = 0x4, fixed_abs, tag = 'smem constant byte address 0x4 - core index']
  #allocation1 [shape = 'u32[144,128]{1,0:T(1,128)}', space=vmem, size = 0x12000, scoped, tag = 'internal scratch']
  #allocation2 [shape = 'f32[2,10,4]{2,1,0:T(8,128)}', space=vmem, size = 0x4000, scoped, tag = 'scratch operand']
  #allocation3 [shape = 'f32[2,32]{1,0:T(2,128)}', space=vmem, size = 0x400, scoped, tag = 'scratch operand']
  %s0 = inlined_call_operand.vmem [shape: f32[2,8,4], index: 0, kind: input, shape index: {}]
  %s1 = inlined_call_operand.hbm [shape: f32[57,128], index: 1, kind: input, shape index: {}]
  %s2 = inlined_call_operand.hbm [shape: f32[1,2], index: 2, kind: output, shape index: {}]
  %s3 = sld [smem:[#allocation0]]
  $region22: #{tpu_custom_call.1} parent=0
    _
  %s5 = ssub.s32 1, %s3
  %s6 = scalar_select 0, %s5, %s3
  $region1: #{tpu_custom_call.1} parent=0
    #allocation4 [shape = 'u8[32768]{0}', space=vmem, size = 0x8000, scoped, tag = 'input window, operand 1, single buffered']
    #allocation5 [shape = 's32[1]{0}', space=sflag, size = 0x4, scoped, tag = 'scoped memory for tpu_custom_call.1']
    #allocation6 [shape = 's32[1]{0}', space=sflag, size = 0x4, scoped, tag = 'scoped memory for tpu_custom_call.1']
    #allocation7 [shape = 'u8[512]{0}', space=vmem, size = 0x400, scoped, tag = 'output window, operand 0, single buffered']
    %7 = vsyncpa [#allocation5], 0
    %8 = vsyncpa [#allocation6], 0
    // Predicated region
    $region2: #{tpu_custom_call.1} parent=1 // pred_check
      _
    $region3: #{tpu_custom_call.1} parent=1 // pred_check_branch
      %10 = sbr.rel (0) target = $region5
    $region4: #{tpu_custom_call.1} parent=1 // pred_region
      _
    $region5: #{tpu_custom_call.1} parent=1 // pred_fallthru
      _
    // Predicated region
    $region6: #{tpu_custom_call.1} parent=1 // pred_check
      _
    $region7: #{tpu_custom_call.1} parent=1 // pred_check_branch
      %12 = sbr.rel (0) target = $region9
    $region8: #{tpu_custom_call.1} parent=1 // pred_region
      %s14 = ssub.s32 1024, 1024
      %15 = vsyncadd [#allocation5], %s14
      %s16 = sshll.u32 [#allocation4], 4
      %s17 = int_to_ptr.vmem [resolvable:$true] %s16
      %22 = dma.hbm_to_vmem [thread:$0]  %s1, 1024, %s17, [#allocation5], 128, 128, 8
    $region9: #{tpu_custom_call.1} parent=1 // pred_fallthru
      _
    // Predicated region
    $region10: #{tpu_custom_call.1} parent=1 // pred_check
      _
    $region11: #{tpu_custom_call.1} parent=1 // pred_check_branch
      %24 = sbr.rel (0) target = $region13
    $region12: #{tpu_custom_call.1} parent=1 // pred_region
      %25 = dma.done [#allocation5], 1024
    $region13: #{tpu_custom_call.1} parent=1 // pred_fallthru
      _
    %v26 = vld [vmem:[#allocation4] sm:$0xff]
    %v27 = vld [vmem:[#allocation4 + $0x8] sm:$0xf]
    %v28 = vld [vmem:[#allocation4 + $0xc] sm:$0x1]
    %v29 = vld [vmem:[#allocation4 + $0xd] sm:$0xff]
    %v30 = vld [vmem:[#allocation4 + $0x15] sm:$0x1]
    %v31 = vld [vmem:[#allocation4 + $0x16] sm:$0xff]
    %v32 = vld [vmem:[#allocation4 + $0x1e] sm:$0xff]
    %v33 = vld [vmem:[#allocation4 + $0x26] sm:$0xff]
    %v34 = vld [vmem:[#allocation4 + $0x2e] sm:$0xff]
    %v35 = vld [vmem:[#allocation4 + $0x36] sm:$0x1]
    %v36 = vld [vmem:[#allocation4 + $0x37] sm:$0x1]
    %v37 = vld [vmem:[#allocation4 + $0x38] sm:$0x1]
    %vm38 = vcmask 31744
    %39 = vst.msk [vmem:[#allocation2] sm:$0xff] %vm38, 0.0
    %vm40 = vcmask 25600
    %41 = vst.msk [vmem:[#allocation2 + $0x8] sm:$0x3] %vm40, 0.0
    %42 = vst.msk [vmem:[#allocation2 + $0x10] sm:$0xff] %vm38, 0.0
    %43 = vst.msk [vmem:[#allocation2 + $0x18] sm:$0x3] %vm40, 0.0
    %v44 = vld [vmem:[%s0] sm:$0xff]
    %v45 = vld [vmem:[%s0 + $0x8] sm:$0xff]
    %46 = vst.msk [vmem:[#allocation2 + $0x1] sm:$0xff] %vm38, %v44
    %47 = vst.msk [vmem:[#allocation2 + $0x11] sm:$0xff] %vm38, %v45
    %v48 = vld [vmem:[#allocation2] sm:$0xff]
    %v49 = vld [vmem:[#allocation2 + $0x8] sm:$0x3]
    %v50 = vld [vmem:[#allocation2 + $0x10] sm:$0xff]
    %v51 = vld [vmem:[#allocation2 + $0x18] sm:$0x3]
    %vm56 = vcmask 1046528
    %v57 = vrot.slane %v48, 1
    %v58 = vrot.slane %v49, 1
    %v59 = vsel %vm56, %v57, %v58
    %v60 = vrot.slane %v50, 1
    %v61 = vrot.slane %v51, 1
    %v62 = vsel %vm56, %v60, %v61
    %63 = vrot.lane.b32.xlu0 %v59, 4
    %v64 = vpop.permute.xlu0 %63
    %65 = vrot.lane.b32.xlu0 %v62, 4
    %v66 = vpop.permute.xlu0 %65
    %vm69 = vcmask 1045504
    %v70 = vrot.slane %v48, 2
    %v71 = vrot.slane %v49, 2
    %v72 = vsel %vm69, %v70, %v71
    %v73 = vrot.slane %v50, 2
    %v74 = vrot.slane %v51, 2
    %v75 = vsel %vm69, %v73, %v74
    %76 = vrot.lane.b32.xlu0 %v72, 8
    %v77 = vpop.permute.xlu0 %76
    %78 = vrot.lane.b32.xlu0 %v75, 8
    %v79 = vpop.permute.xlu0 %78
    %v82 = vsel %vm38, %v48, %v64
    %v83 = vsel %vm38, %v50, %v66
    %vm84 = vcmask 64512
    %v85 = vsel %vm84, %v82, %v77
    %v86 = vsel %vm84, %v83, %v79
    %v87 = vlaneseq
    %v88 = vshrl.u32 %v87, 7
    %v89 = vsub.s32 0, %v88
    %v90 = vrot.slane %v28, %v89
    %vm91 = vcmask 97280
    %v93 = vsel %vm91, %v85, 0
    %v96 = vsel %vm91, %v86, 0
    %vm98 = vcmask 1043456
    %v100 = vsel %vm98, %v27, 0
    %102 = vmatprep.subr.mxu0 0.0
    %103 = vmatpush1.msra.mxu0 0.0
    %104 = vmatprep.subr.mxu0 0.0
    %105 = vmatpush1.msra.mxu0 0.0
    %106 = vmatprep.subr.mxu0 0.0
    %107 = vmatpush1.msra.mxu0 0.0
    %108 = vmatprep.subr.mxu0 0.0
    %109 = vmatpush1.msra.mxu0 0.0
    %110 = vmatprep.subr.mxu0 0.0
    %111 = vmatpush1.msra.mxu0 0.0
    %112 = vmatprep.subr.mxu0 0.0
    %113 = vmatpush1.msra.mxu0 0.0
    %114 = vmatprep.subr.mxu0 0.0
    %115 = vmatpush1.msra.mxu0 0.0
    %116 = vmatprep.subr.mxu0 0.0
    %117 = vmatpush1.msra.mxu0 0.0
    %118 = vmatprep.subr.mxu0 0.0
    %119 = vmatpush1.msra.mxu0 0.0
    %120 = vmatprep.subr.mxu0 0.0
    %121 = vmatpush1.msra.mxu0 0.0
    %122 = vmatprep.subr.mxu0 0.0
    %123 = vmatpush1.msra.mxu0 0.0
    %124 = vmatprep.subr.mxu0 0.0
    %125 = vmatpush1.msra.mxu0 0.0
    %126 = vmatprep.subr.mxu0 0.0
    %127 = vmatpush1.msra.mxu0 0.0
    %128 = vmatprep.subr.mxu0 0.0
    %129 = vmatpush1.msra.mxu0 0.0
    %130 = vmatprep.subr.mxu0 0.0
    %131 = vmatpush1.msra.mxu0 %v100
    %132 = vmatprep.subr.mxu0 0.0
    %133 = vmatpush1.msra.mxu0 %v26
    %134 = vmatprep.subr.mxu0 0.0
    %135 = vmatpush2.msra.mxu0 0.0
    %136 = vmatprep.subr.mxu0 0.0
    %137 = vmatpush2.msra.mxu0 0.0
    %138 = vmatprep.subr.mxu0 0.0
    %139 = vmatpush2.msra.mxu0 0.0
    %140 = vmatprep.subr.mxu0 0.0
    %141 = vmatpush2.msra.mxu0 0.0
    %142 = vmatprep.subr.mxu0 0.0
    %143 = vmatpush2.msra.mxu0 0.0
    %144 = vmatprep.subr.mxu0 0.0
    %145 = vmatpush2.msra.mxu0 0.0
    %146 = vmatprep.subr.mxu0 0.0
    %147 = vmatpush2.msra.mxu0 0.0
    %148 = vmatprep.subr.mxu0 0.0
    %149 = vmatpush2.msra.mxu0 0.0
    %150 = vmatprep.subr.mxu0 0.0
    %151 = vmatpush2.msra.mxu0 0.0
    %152 = vmatprep.subr.mxu0 0.0
    %153 = vmatpush2.msra.mxu0 0.0
    %154 = vmatprep.subr.mxu0 0.0
    %155 = vmatpush2.msra.mxu0 0.0
    %156 = vmatprep.subr.mxu0 0.0
    %157 = vmatpush2.msra.mxu0 0.0
    %158 = vmatprep.subr.mxu0 0.0
    %159 = vmatpush2.msra.mxu0 0.0
    %160 = vmatprep.subr.mxu0 0.0
    %161 = vmatpush2.msra.mxu0 0.0
    %162 = vmatprep.subr.mxu0 0.0
    %163 = vmatpush2.msra.mxu0 0.0
    %164 = vmatprep.subr.mxu0 0.0
    %165 = vmatpush2.msra.mxu0 0.0
    %166 = vmatprep.mubr.f32.mxu0 0.0
    %167 = vmatmul.mubr.f32.gmra.mxu0 %v93
    %v168 = vpop.f32.mrf.mxu0
    %v169 = vadd.f32 %v90, %v168
    %v170 = vpop.f32.mrf.mxu0
    %171 = vmatprep.mubr.f32.mxu0 0.0
    %172 = vmatmul.mubr.f32.gmra.mxu0 %v96
    %v173 = vpop.f32.mrf.mxu0
    %v174 = vadd.f32 %v90, %v173
    %v175 = vpop.f32.mrf.mxu0
    %176 = vdwg.mxu0
    %v177 = vmax.f32 %v169, 0.0
    %v178 = vmax.f32 %v174, 0.0
    %v181 = vcombine.high %v177, %v177
    %v183 = vunpack.c.l.s4 1983009808
    %v184 = vunpack.c.0.s8 %v183
    %v185 = vlaneseq
    %v186 = vshrl.u32 %v185, 7
    %v187 = vsub.s32 %v184, %v186
    %v188 = vrot.slane %v177, %v187
    %v190 = vunpack.c.l.s4 1983009808
    %v191 = vunpack.c.0.s8 %v190
    %v192 = vlaneseq
    %v193 = vshrl.u32 %v192, 7
    %v194 = vsub.s32 %v191, %v193
    %v195 = vrot.slane %v181, %v194
    %v196 = vcombine.high %v188, %v188
    %v197 = vcombine.high %v195, %v195
    %v198 = vcombine.high %v178, %v178
    %v200 = vunpack.c.l.s4 1983009808
    %v201 = vunpack.c.0.s8 %v200
    %v202 = vlaneseq
    %v203 = vshrl.u32 %v202, 7
    %v204 = vsub.s32 %v201, %v203
    %v205 = vrot.slane %v178, %v204
    %v207 = vunpack.c.l.s4 1983009808
    %v208 = vunpack.c.0.s8 %v207
    %v209 = vlaneseq
    %v210 = vshrl.u32 %v209, 7
    %v211 = vsub.s32 %v208, %v210
    %v212 = vrot.slane %v198, %v211
    %v213 = vcombine.high %v205, %v205
    %v214 = vcombine.high %v212, %v212
    %v223 = vrot.slane %v188, 7
    %v224 = vrot.slane %v223, 2
    %v225 = vrot.slane %v196, 7
    %v226 = vrot.slane %v225, 2
    %v227 = vrot.slane %v195, 7
    %v228 = vrot.slane %v227, 2
    %v229 = vrot.slane %v197, 7
    %v230 = vrot.slane %v229, 2
    %v231 = vrot.slane %v205, 7
    %v232 = vrot.slane %v231, 2
    %v233 = vrot.slane %v213, 7
    %v234 = vrot.slane %v233, 2
    %v235 = vrot.slane %v212, 7
    %v236 = vrot.slane %v235, 2
    %v237 = vrot.slane %v214, 7
    %v238 = vrot.slane %v237, 2
    %v247 = vmax.f32 %v188, %v224
    %v248 = vmax.f32 %v196, %v226
    %v249 = vmax.f32 %v195, %v228
    %v250 = vmax.f32 %v197, %v230
    %v251 = vmax.f32 %v205, %v232
    %v252 = vmax.f32 %v213, %v234
    %v253 = vmax.f32 %v212, %v236
    %v254 = vmax.f32 %v214, %v238
    %v255 = vlaneseq
    %v256 = vshrl.u32 %v255, 7
    %v257 = vsub.s32 0, %v256
    %v258 = vrot.slane %v30, %v257
    %v267 = vlaneseq
    %v268 = vshrl.u32 %v267, 7
    %v269 = vsub.s32 0, %v268
    %v270 = vrot.slane %v247, %v269
    %v271 = vlaneseq
    %v272 = vshrl.u32 %v271, 7
    %v273 = vsub.s32 0, %v272
    %v274 = vrot.slane %v248, %v273
    %v275 = vlaneseq
    %v276 = vshrl.u32 %v275, 7
    %v277 = vsub.s32 0, %v276
    %v278 = vrot.slane %v249, %v277
    %v279 = vlaneseq
    %v280 = vshrl.u32 %v279, 7
    %v281 = vsub.s32 0, %v280
    %v282 = vrot.slane %v250, %v281
    %v283 = vlaneseq
    %v284 = vshrl.u32 %v283, 7
    %v285 = vsub.s32 0, %v284
    %v286 = vrot.slane %v251, %v285
    %v287 = vlaneseq
    %v288 = vshrl.u32 %v287, 7
    %v289 = vsub.s32 0, %v288
    %v290 = vrot.slane %v252, %v289
    %v291 = vlaneseq
    %v292 = vshrl.u32 %v291, 7
    %v293 = vsub.s32 0, %v292
    %v294 = vrot.slane %v253, %v293
    %v295 = vlaneseq
    %v296 = vshrl.u32 %v295, 7
    %v297 = vsub.s32 0, %v296
    %v298 = vrot.slane %v254, %v297
    %vm299 = vcmask 1041409
    %v300 = vsel %vm299, %v274, %v270
    %vm301 = vcmask 1042434
    %v302 = vsel %vm301, %v278, %v300
    %vm303 = vcmask 1043459
    %v304 = vsel %vm303, %v282, %v302
    %vm305 = vcmask 1044484
    %v306 = vsel %vm305, %v286, %v304
    %vm307 = vcmask 1045509
    %v308 = vsel %vm307, %v290, %v306
    %vm309 = vcmask 1046534
    %v310 = vsel %vm309, %v294, %v308
    %vm311 = vcmask 1047559
    %v312 = vsel %vm311, %v298, %v310
    %v313 = vsel %vm84, %v312, 0
    %315 = vmatprep.subr.mxu0 0.0
    %316 = vmatpush1.msra.mxu0 0.0
    %317 = vmatprep.subr.mxu0 0.0
    %318 = vmatpush1.msra.mxu0 0.0
    %319 = vmatprep.subr.mxu0 0.0
    %320 = vmatpush1.msra.mxu0 0.0
    %321 = vmatprep.subr.mxu0 0.0
    %322 = vmatpush1.msra.mxu0 0.0
    %323 = vmatprep.subr.mxu0 0.0
    %324 = vmatpush1.msra.mxu0 0.0
    %325 = vmatprep.subr.mxu0 0.0
    %326 = vmatpush1.msra.mxu0 0.0
    %327 = vmatprep.subr.mxu0 0.0
    %328 = vmatpush1.msra.mxu0 0.0
    %329 = vmatprep.subr.mxu0 0.0
    %330 = vmatpush1.msra.mxu0 0.0
    %331 = vmatprep.subr.mxu0 0.0
    %332 = vmatpush1.msra.mxu0 0.0
    %333 = vmatprep.subr.mxu0 0.0
    %334 = vmatpush1.msra.mxu0 0.0
    %335 = vmatprep.subr.mxu0 0.0
    %336 = vmatpush1.msra.mxu0 0.0
    %337 = vmatprep.subr.mxu0 0.0
    %338 = vmatpush1.msra.mxu0 0.0
    %339 = vmatprep.subr.mxu0 0.0
    %340 = vmatpush1.msra.mxu0 0.0
    %341 = vmatprep.subr.mxu0 0.0
    %342 = vmatpush1.msra.mxu0 0.0
    %343 = vmatprep.subr.mxu0 0.0
    %344 = vmatpush1.msra.mxu0 0.0
    %345 = vmatprep.subr.mxu0 0.0
    %346 = vmatpush1.msra.mxu0 %v29
    %347 = vmatprep.subr.mxu0 0.0
    %348 = vmatpush2.msra.mxu0 0.0
    %349 = vmatprep.subr.mxu0 0.0
    %350 = vmatpush2.msra.mxu0 0.0
    %351 = vmatprep.subr.mxu0 0.0
    %352 = vmatpush2.msra.mxu0 0.0
    %353 = vmatprep.subr.mxu0 0.0
    %354 = vmatpush2.msra.mxu0 0.0
    %355 = vmatprep.subr.mxu0 0.0
    %356 = vmatpush2.msra.mxu0 0.0
    %357 = vmatprep.subr.mxu0 0.0
    %358 = vmatpush2.msra.mxu0 0.0
    %359 = vmatprep.subr.mxu0 0.0
    %360 = vmatpush2.msra.mxu0 0.0
    %361 = vmatprep.subr.mxu0 0.0
    %362 = vmatpush2.msra.mxu0 0.0
    %363 = vmatprep.subr.mxu0 0.0
    %364 = vmatpush2.msra.mxu0 0.0
    %365 = vmatprep.subr.mxu0 0.0
    %366 = vmatpush2.msra.mxu0 0.0
    %367 = vmatprep.subr.mxu0 0.0
    %368 = vmatpush2.msra.mxu0 0.0
    %369 = vmatprep.subr.mxu0 0.0
    %370 = vmatpush2.msra.mxu0 0.0
    %371 = vmatprep.subr.mxu0 0.0
    %372 = vmatpush2.msra.mxu0 0.0
    %373 = vmatprep.subr.mxu0 0.0
    %374 = vmatpush2.msra.mxu0 0.0
    %375 = vmatprep.subr.mxu0 0.0
    %376 = vmatpush2.msra.mxu0 0.0
    %377 = vmatprep.subr.mxu0 0.0
    %378 = vmatpush2.msra.mxu0 0.0
    %379 = vmatprep.mubr.f32.mxu0 0.0
    %380 = vmatmul.mubr.f32.gmra.mxu0 %v313
    %v381 = vpop.f32.mrf.mxu0
    %v382 = vadd.f32 %v258, %v381
    %v383 = vpop.f32.mrf.mxu0
    %384 = vdwg.mxu0
    %v386 = vcombine.high %v382, %v382
    %vm388 = vcmask 254976
    %389 = vst.msk [vmem:[#allocation3] sm:$0x3] %vm388, 0.0
    %v390 = vxor.u32 %v382, 2147483648
    %v391 = vxor.u32 %v386, 2147483648
    %v392 = vmul.f32 %v390, 1.442695
    %v393 = vpow.pop %v392
    %v394 = vmul.f32 %v391, 1.442695
    %v395 = vpow.pop %v394
    %v396 = vadd.f32 %v393, 1.0
    %v397 = vadd.f32 %v395, 1.0
    %v398 = vrcp.pop %v396
    %v399 = vmul.f32 1.0, %v398
    %v400 = vrcp.pop %v397
    %v401 = vmul.f32 1.0, %v400
    %v402 = vtanh.pop %v382
    %v403 = vtanh.pop %v386
    %v404 = vmul.f32 %v399, 0.0
    %v405 = vmul.f32 %v401, 0.0
    %408 = vrot.lane.b32.xlu0 %v402, 80
    %v409 = vpop.permute.xlu0 %408
    %410 = vrot.lane.b32.xlu0 %v403, 80
    %v411 = vpop.permute.xlu0 %410
    %v414 = vmul.f32 %v399, %v409
    %v415 = vmul.f32 %v401, %v411
    %418 = vrot.lane.b32.xlu0 %v414, 16
    %v419 = vpop.permute.xlu0 %418
    %420 = vrot.lane.b32.xlu0 %v415, 16
    %v421 = vpop.permute.xlu0 %420
    %v424 = vadd.f32 %v404, %v419
    %v425 = vadd.f32 %v405, %v421
    %v426 = vtanh.pop %v424
    %v427 = vtanh.pop %v425
    %430 = vrot.lane.b32.xlu0 %v426, 16
    %v431 = vpop.permute.xlu0 %430
    %432 = vrot.lane.b32.xlu0 %v427, 16
    %v433 = vpop.permute.xlu0 %432
    %v436 = vmul.f32 %v399, %v431
    %v437 = vmul.f32 %v401, %v433
    %v440 = vlaneseq
    %v441 = vshrl.u32 %v440, 7
    %v442 = vsub.s32 0, %v441
    %v443 = vrot.slane %v436, %v442
    %v444 = vlaneseq
    %v445 = vshrl.u32 %v444, 7
    %v446 = vsub.s32 0, %v445
    %v447 = vrot.slane %v437, %v446
    %v448 = vsel %vm299, %v447, %v443
    %449 = vrot.lane.b32.xlu0 %v448, 96
    %v450 = vpop.permute.xlu0 %449
    %vm452 = vcmask 123904
    %453 = vst.msk [vmem:[#allocation3] sm:$0x3] %vm452, %v450
    %v454 = vld [vmem:[#allocation3] sm:$0x3]
    %vm455 = vcmask 261120
    %v457 = vsel %vm455, %v454, 0
    %459 = vmatprep.subr.mxu0 0.0
    %460 = vmatpush1.msra.mxu0 0.0
    %461 = vmatprep.subr.mxu0 0.0
    %462 = vmatpush1.msra.mxu0 0.0
    %463 = vmatprep.subr.mxu0 0.0
    %464 = vmatpush1.msra.mxu0 0.0
    %465 = vmatprep.subr.mxu0 0.0
    %466 = vmatpush1.msra.mxu0 0.0
    %467 = vmatprep.subr.mxu0 0.0
    %468 = vmatpush1.msra.mxu0 0.0
    %469 = vmatprep.subr.mxu0 0.0
    %470 = vmatpush1.msra.mxu0 0.0
    %471 = vmatprep.subr.mxu0 0.0
    %472 = vmatpush1.msra.mxu0 0.0
    %473 = vmatprep.subr.mxu0 0.0
    %474 = vmatpush1.msra.mxu0 0.0
    %475 = vmatprep.subr.mxu0 0.0
    %476 = vmatpush1.msra.mxu0 0.0
    %477 = vmatprep.subr.mxu0 0.0
    %478 = vmatpush1.msra.mxu0 0.0
    %479 = vmatprep.subr.mxu0 0.0
    %480 = vmatpush1.msra.mxu0 0.0
    %481 = vmatprep.subr.mxu0 0.0
    %482 = vmatpush1.msra.mxu0 0.0
    %483 = vmatprep.subr.mxu0 0.0
    %484 = vmatpush1.msra.mxu0 %v34
    %485 = vmatprep.subr.mxu0 0.0
    %486 = vmatpush1.msra.mxu0 %v33
    %487 = vmatprep.subr.mxu0 0.0
    %488 = vmatpush1.msra.mxu0 %v32
    %489 = vmatprep.subr.mxu0 0.0
    %490 = vmatpush1.msra.mxu0 %v31
    %491 = vmatprep.subr.mxu0 0.0
    %492 = vmatpush2.msra.mxu0 0.0
    %493 = vmatprep.subr.mxu0 0.0
    %494 = vmatpush2.msra.mxu0 0.0
    %495 = vmatprep.subr.mxu0 0.0
    %496 = vmatpush2.msra.mxu0 0.0
    %497 = vmatprep.subr.mxu0 0.0
    %498 = vmatpush2.msra.mxu0 0.0
    %499 = vmatprep.subr.mxu0 0.0
    %500 = vmatpush2.msra.mxu0 0.0
    %501 = vmatprep.subr.mxu0 0.0
    %502 = vmatpush2.msra.mxu0 0.0
    %503 = vmatprep.subr.mxu0 0.0
    %504 = vmatpush2.msra.mxu0 0.0
    %505 = vmatprep.subr.mxu0 0.0
    %506 = vmatpush2.msra.mxu0 0.0
    %507 = vmatprep.subr.mxu0 0.0
    %508 = vmatpush2.msra.mxu0 0.0
    %509 = vmatprep.subr.mxu0 0.0
    %510 = vmatpush2.msra.mxu0 0.0
    %511 = vmatprep.subr.mxu0 0.0
    %512 = vmatpush2.msra.mxu0 0.0
    %513 = vmatprep.subr.mxu0 0.0
    %514 = vmatpush2.msra.mxu0 0.0
    %515 = vmatprep.subr.mxu0 0.0
    %516 = vmatpush2.msra.mxu0 0.0
    %517 = vmatprep.subr.mxu0 0.0
    %518 = vmatpush2.msra.mxu0 0.0
    %519 = vmatprep.subr.mxu0 0.0
    %520 = vmatpush2.msra.mxu0 0.0
    %521 = vmatprep.subr.mxu0 0.0
    %522 = vmatpush2.msra.mxu0 0.0
    %523 = vmatprep.mubr.f32.mxu0 0.0
    %524 = vmatmul.mubr.f32.gmra.mxu0 %v457
    %v525 = vpop.f32.mrf.mxu0
    %v526 = vadd.f32 0.0, %v525
    %v527 = vpop.f32.mrf.mxu0
    %528 = vdwg.mxu0
    %v529 = vlaneseq
    %v530 = vshrl.u32 %v529, 7
    %v531 = vsub.s32 0, %v530
    %v532 = vrot.slane %v35, %v531
    %534 = vrot.lane.b32.xlu0 %v532, 64
    %v535 = vpop.permute.xlu0 %534
    %v537 = vadd.f32 %v526, %v535
    %v538 = vxor.u32 %v537, 2147483648
    %v539 = vmul.f32 %v538, 1.442695
    %v540 = vpow.pop %v539
    %v541 = vadd.f32 %v540, 1.0
    %v542 = vrcp.pop %v541
    %v543 = vmul.f32 1.0, %v542
    %v544 = vtanh.pop %v537
    %v545 = vmul.f32 %v543, 0.0
    %547 = vrot.lane.b32.xlu0 %v544, 80
    %v548 = vpop.permute.xlu0 %547
    %v550 = vmul.f32 %v543, %v548
    %552 = vrot.lane.b32.xlu0 %v550, 16
    %v553 = vpop.permute.xlu0 %552
    %v555 = vadd.f32 %v545, %v553
    %v556 = vtanh.pop %v555
    %558 = vrot.lane.b32.xlu0 %v556, 16
    %v559 = vpop.permute.xlu0 %558
    %v561 = vmul.f32 %v543, %v559
    %563 = vrot.lane.b32.xlu0 %v561, 48
    %v564 = vpop.permute.xlu0 %563
    %vm566 = vcmask 255104
    %567 = vst.msk [vmem:[#allocation3] sm:$0x3] %vm566, %v564
    %v569 = vrot.slane %v526, 7
    %v572 = vadd.f32 %v382, %v569
    %v573 = vadd.f32 %v386, %v526
    %v574 = vxor.u32 %v572, 2147483648
    %v575 = vxor.u32 %v573, 2147483648
    %v576 = vmul.f32 %v574, 1.442695
    %v577 = vpow.pop %v576
    %v578 = vmul.f32 %v575, 1.442695
    %v579 = vpow.pop %v578
    %v580 = vadd.f32 %v577, 1.0
    %v581 = vadd.f32 %v579, 1.0
    %v582 = vrcp.pop %v580
    %v583 = vmul.f32 1.0, %v582
    %v584 = vrcp.pop %v581
    %v585 = vmul.f32 1.0, %v584
    %v586 = vtanh.pop %v572
    %v587 = vtanh.pop %v573
    %v590 = vrot.slane %v424, 7
    %v591 = vrot.slane %v425, 7
    %v594 = vmul.f32 %v583, %v590
    %v595 = vmul.f32 %v585, %v591
    %598 = vrot.lane.b32.xlu0 %v586, 80
    %v599 = vpop.permute.xlu0 %598
    %600 = vrot.lane.b32.xlu0 %v587, 80
    %v601 = vpop.permute.xlu0 %600
    %v604 = vmul.f32 %v583, %v599
    %v605 = vmul.f32 %v585, %v601
    %608 = vrot.lane.b32.xlu0 %v604, 16
    %v609 = vpop.permute.xlu0 %608
    %610 = vrot.lane.b32.xlu0 %v605, 16
    %v611 = vpop.permute.xlu0 %610
    %v614 = vadd.f32 %v594, %v609
    %v615 = vadd.f32 %v595, %v611
    %v616 = vtanh.pop %v614
    %v617 = vtanh.pop %v615
    %620 = vrot.lane.b32.xlu0 %v616, 16
    %v621 = vpop.permute.xlu0 %620
    %622 = vrot.lane.b32.xlu0 %v617, 16
    %v623 = vpop.permute.xlu0 %622
    %v626 = vmul.f32 %v583, %v621
    %v627 = vmul.f32 %v585, %v623
    %v630 = vlaneseq
    %v631 = vshrl.u32 %v630, 7
    %v632 = vsub.s32 1, %v631
    %v633 = vrot.slane %v626, %v632
    %v634 = vlaneseq
    %v635 = vshrl.u32 %v634, 7
    %v636 = vsub.s32 1, %v635
    %v637 = vrot.slane %v627, %v636
    %v638 = vsel %vm301, %v637, %v633
    %639 = vrot.lane.b32.xlu0 %v638, 96
    %v640 = vpop.permute.xlu0 %639
    %vm642 = vcmask 124929
    %643 = vst.msk [vmem:[#allocation3 - $0x1] sm:$0x6] %vm642, %v640
    %v644 = vld [vmem:[#allocation3] sm:$0x3]
    %v646 = vsel %vm455, %v644, 0
    %648 = vmatprep.subr.mxu0 0.0
    %649 = vmatpush1.msra.mxu0 0.0
    %650 = vmatprep.subr.mxu0 0.0
    %651 = vmatpush1.msra.mxu0 0.0
    %652 = vmatprep.subr.mxu0 0.0
    %653 = vmatpush1.msra.mxu0 0.0
    %654 = vmatprep.subr.mxu0 0.0
    %655 = vmatpush1.msra.mxu0 0.0
    %656 = vmatprep.subr.mxu0 0.0
    %657 = vmatpush1.msra.mxu0 0.0
    %658 = vmatprep.subr.mxu0 0.0
    %659 = vmatpush1.msra.mxu0 0.0
    %660 = vmatprep.subr.mxu0 0.0
    %661 = vmatpush1.msra.mxu0 0.0
    %662 = vmatprep.subr.mxu0 0.0
    %663 = vmatpush1.msra.mxu0 0.0
    %664 = vmatprep.subr.mxu0 0.0
    %665 = vmatpush1.msra.mxu0 0.0
    %666 = vmatprep.subr.mxu0 0.0
    %667 = vmatpush1.msra.mxu0 0.0
    %668 = vmatprep.subr.mxu0 0.0
    %669 = vmatpush1.msra.mxu0 0.0
    %670 = vmatprep.subr.mxu0 0.0
    %671 = vmatpush1.msra.mxu0 0.0
    %672 = vmatprep.subr.mxu0 0.0
    %673 = vmatpush1.msra.mxu0 %v34
    %674 = vmatprep.subr.mxu0 0.0
    %675 = vmatpush1.msra.mxu0 %v33
    %676 = vmatprep.subr.mxu0 0.0
    %677 = vmatpush1.msra.mxu0 %v32
    %678 = vmatprep.subr.mxu0 0.0
    %679 = vmatpush1.msra.mxu0 %v31
    %680 = vmatprep.subr.mxu0 0.0
    %681 = vmatpush2.msra.mxu0 0.0
    %682 = vmatprep.subr.mxu0 0.0
    %683 = vmatpush2.msra.mxu0 0.0
    %684 = vmatprep.subr.mxu0 0.0
    %685 = vmatpush2.msra.mxu0 0.0
    %686 = vmatprep.subr.mxu0 0.0
    %687 = vmatpush2.msra.mxu0 0.0
    %688 = vmatprep.subr.mxu0 0.0
    %689 = vmatpush2.msra.mxu0 0.0
    %690 = vmatprep.subr.mxu0 0.0
    %691 = vmatpush2.msra.mxu0 0.0
    %692 = vmatprep.subr.mxu0 0.0
    %693 = vmatpush2.msra.mxu0 0.0
    %694 = vmatprep.subr.mxu0 0.0
    %695 = vmatpush2.msra.mxu0 0.0
    %696 = vmatprep.subr.mxu0 0.0
    %697 = vmatpush2.msra.mxu0 0.0
    %698 = vmatprep.subr.mxu0 0.0
    %699 = vmatpush2.msra.mxu0 0.0
    %700 = vmatprep.subr.mxu0 0.0
    %701 = vmatpush2.msra.mxu0 0.0
    %702 = vmatprep.subr.mxu0 0.0
    %703 = vmatpush2.msra.mxu0 0.0
    %704 = vmatprep.subr.mxu0 0.0
    %705 = vmatpush2.msra.mxu0 0.0
    %706 = vmatprep.subr.mxu0 0.0
    %707 = vmatpush2.msra.mxu0 0.0
    %708 = vmatprep.subr.mxu0 0.0
    %709 = vmatpush2.msra.mxu0 0.0
    %710 = vmatprep.subr.mxu0 0.0
    %711 = vmatpush2.msra.mxu0 0.0
    %712 = vmatprep.mubr.f32.mxu0 0.0
    %713 = vmatmul.mubr.f32.gmra.mxu0 %v646
    %v714 = vpop.f32.mrf.mxu0
    %v715 = vadd.f32 0.0, %v714
    %v716 = vpop.f32.mrf.mxu0
    %717 = vdwg.mxu0
    %v718 = vadd.f32 %v715, %v535
    %v719 = vxor.u32 %v718, 2147483648
    %v720 = vmul.f32 %v719, 1.442695
    %v721 = vpow.pop %v720
    %v722 = vadd.f32 %v721, 1.0
    %v723 = vrcp.pop %v722
    %v724 = vmul.f32 1.0, %v723
    %v725 = vtanh.pop %v718
    %v726 = vmul.f32 %v724, %v555
    %728 = vrot.lane.b32.xlu0 %v725, 80
    %v729 = vpop.permute.xlu0 %728
    %v731 = vmul.f32 %v724, %v729
    %733 = vrot.lane.b32.xlu0 %v731, 16
    %v734 = vpop.permute.xlu0 %733
    %v736 = vadd.f32 %v726, %v734
    %v737 = vtanh.pop %v736
    %739 = vrot.lane.b32.xlu0 %v737, 16
    %v740 = vpop.permute.xlu0 %739
    %v742 = vmul.f32 %v724, %v740
    %744 = vrot.lane.b32.xlu0 %v742, 48
    %v745 = vpop.permute.xlu0 %744
    %747 = vst.msk [vmem:[#allocation3] sm:$0x3] %vm566, %v745
    %v749 = vrot.slane %v715, 6
    %v750 = vrot.slane %v715, 7
    %v753 = vadd.f32 %v382, %v749
    %v754 = vadd.f32 %v386, %v750
    %v755 = vxor.u32 %v753, 2147483648
    %v756 = vxor.u32 %v754, 2147483648
    %v757 = vmul.f32 %v755, 1.442695
    %v758 = vpow.pop %v757
    %v759 = vmul.f32 %v756, 1.442695
    %v760 = vpow.pop %v759
    %v761 = vadd.f32 %v758, 1.0
    %v762 = vadd.f32 %v760, 1.0
    %v763 = vrcp.pop %v761
    %v764 = vmul.f32 1.0, %v763
    %v765 = vrcp.pop %v762
    %v766 = vmul.f32 1.0, %v765
    %v767 = vtanh.pop %v753
    %v768 = vtanh.pop %v754
    %v771 = vrot.slane %v614, 7
    %v772 = vrot.slane %v615, 7
    %v775 = vmul.f32 %v764, %v771
    %v776 = vmul.f32 %v766, %v772
    %779 = vrot.lane.b32.xlu0 %v767, 80
    %v780 = vpop.permute.xlu0 %779
    %781 = vrot.lane.b32.xlu0 %v768, 80
    %v782 = vpop.permute.xlu0 %781
    %v785 = vmul.f32 %v764, %v780
    %v786 = vmul.f32 %v766, %v782
    %789 = vrot.lane.b32.xlu0 %v785, 16
    %v790 = vpop.permute.xlu0 %789
    %791 = vrot.lane.b32.xlu0 %v786, 16
    %v792 = vpop.permute.xlu0 %791
    %v795 = vadd.f32 %v775, %v790
    %v796 = vadd.f32 %v776, %v792
    %v797 = vtanh.pop %v795
    %v798 = vtanh.pop %v796
    %801 = vrot.lane.b32.xlu0 %v797, 16
    %v802 = vpop.permute.xlu0 %801
    %803 = vrot.lane.b32.xlu0 %v798, 16
    %v804 = vpop.permute.xlu0 %803
    %v807 = vmul.f32 %v764, %v802
    %v808 = vmul.f32 %v766, %v804
    %v811 = vlaneseq
    %v812 = vshrl.u32 %v811, 7
    %v813 = vsub.s32 2, %v812
    %v814 = vrot.slane %v807, %v813
    %v815 = vlaneseq
    %v816 = vshrl.u32 %v815, 7
    %v817 = vsub.s32 2, %v816
    %v818 = vrot.slane %v808, %v817
    %v819 = vsel %vm303, %v818, %v814
    %820 = vrot.lane.b32.xlu0 %v819, 96
    %v821 = vpop.permute.xlu0 %820
    %vm823 = vcmask 125954
    %824 = vst.msk [vmem:[#allocation3 - $0x2] sm:$0xc] %vm823, %v821
    %v825 = vld [vmem:[#allocation3] sm:$0x3]
    %v827 = vsel %vm455, %v825, 0
    %829 = vmatprep.subr.mxu0 0.0
    %830 = vmatpush1.msra.mxu0 0.0
    %831 = vmatprep.subr.mxu0 0.0
    %832 = vmatpush1.msra.mxu0 0.0
    %833 = vmatprep.subr.mxu0 0.0
    %834 = vmatpush1.msra.mxu0 0.0
    %835 = vmatprep.subr.mxu0 0.0
    %836 = vmatpush1.msra.mxu0 0.0
    %837 = vmatprep.subr.mxu0 0.0
    %838 = vmatpush1.msra.mxu0 0.0
    %839 = vmatprep.subr.mxu0 0.0
    %840 = vmatpush1.msra.mxu0 0.0
    %841 = vmatprep.subr.mxu0 0.0
    %842 = vmatpush1.msra.mxu0 0.0
    %843 = vmatprep.subr.mxu0 0.0
    %844 = vmatpush1.msra.mxu0 0.0
    %845 = vmatprep.subr.mxu0 0.0
    %846 = vmatpush1.msra.mxu0 0.0
    %847 = vmatprep.subr.mxu0 0.0
    %848 = vmatpush1.msra.mxu0 0.0
    %849 = vmatprep.subr.mxu0 0.0
    %850 = vmatpush1.msra.mxu0 0.0
    %851 = vmatprep.subr.mxu0 0.0
    %852 = vmatpush1.msra.mxu0 0.0
    %853 = vmatprep.subr.mxu0 0.0
    %854 = vmatpush1.msra.mxu0 %v34
    %855 = vmatprep.subr.mxu0 0.0
    %856 = vmatpush1.msra.mxu0 %v33
    %857 = vmatprep.subr.mxu0 0.0
    %858 = vmatpush1.msra.mxu0 %v32
    %859 = vmatprep.subr.mxu0 0.0
    %860 = vmatpush1.msra.mxu0 %v31
    %861 = vmatprep.subr.mxu0 0.0
    %862 = vmatpush2.msra.mxu0 0.0
    %863 = vmatprep.subr.mxu0 0.0
    %864 = vmatpush2.msra.mxu0 0.0
    %865 = vmatprep.subr.mxu0 0.0
    %866 = vmatpush2.msra.mxu0 0.0
    %867 = vmatprep.subr.mxu0 0.0
    %868 = vmatpush2.msra.mxu0 0.0
    %869 = vmatprep.subr.mxu0 0.0
    %870 = vmatpush2.msra.mxu0 0.0
    %871 = vmatprep.subr.mxu0 0.0
    %872 = vmatpush2.msra.mxu0 0.0
    %873 = vmatprep.subr.mxu0 0.0
    %874 = vmatpush2.msra.mxu0 0.0
    %875 = vmatprep.subr.mxu0 0.0
    %876 = vmatpush2.msra.mxu0 0.0
    %877 = vmatprep.subr.mxu0 0.0
    %878 = vmatpush2.msra.mxu0 0.0
    %879 = vmatprep.subr.mxu0 0.0
    %880 = vmatpush2.msra.mxu0 0.0
    %881 = vmatprep.subr.mxu0 0.0
    %882 = vmatpush2.msra.mxu0 0.0
    %883 = vmatprep.subr.mxu0 0.0
    %884 = vmatpush2.msra.mxu0 0.0
    %885 = vmatprep.subr.mxu0 0.0
    %886 = vmatpush2.msra.mxu0 0.0
    %887 = vmatprep.subr.mxu0 0.0
    %888 = vmatpush2.msra.mxu0 0.0
    %889 = vmatprep.subr.mxu0 0.0
    %890 = vmatpush2.msra.mxu0 0.0
    %891 = vmatprep.subr.mxu0 0.0
    %892 = vmatpush2.msra.mxu0 0.0
    %893 = vmatprep.mubr.f32.mxu0 0.0
    %894 = vmatmul.mubr.f32.gmra.mxu0 %v827
    %v895 = vpop.f32.mrf.mxu0
    %v896 = vadd.f32 0.0, %v895
    %v897 = vpop.f32.mrf.mxu0
    %898 = vdwg.mxu0
    %v899 = vadd.f32 %v896, %v535
    %v900 = vxor.u32 %v899, 2147483648
    %v901 = vmul.f32 %v900, 1.442695
    %v902 = vpow.pop %v901
    %v903 = vadd.f32 %v902, 1.0
    %v904 = vrcp.pop %v903
    %v905 = vmul.f32 1.0, %v904
    %v906 = vtanh.pop %v899
    %v907 = vmul.f32 %v905, %v736
    %909 = vrot.lane.b32.xlu0 %v906, 80
    %v910 = vpop.permute.xlu0 %909
    %v912 = vmul.f32 %v905, %v910
    %914 = vrot.lane.b32.xlu0 %v912, 16
    %v915 = vpop.permute.xlu0 %914
    %v917 = vadd.f32 %v907, %v915
    %v918 = vtanh.pop %v917
    %920 = vrot.lane.b32.xlu0 %v918, 16
    %v921 = vpop.permute.xlu0 %920
    %v923 = vmul.f32 %v905, %v921
    %925 = vrot.lane.b32.xlu0 %v923, 48
    %v926 = vpop.permute.xlu0 %925
    %928 = vst.msk [vmem:[#allocation3] sm:$0x3] %vm566, %v926
    %v930 = vrot.slane %v896, 5
    %v931 = vrot.slane %v896, 6
    %v934 = vadd.f32 %v382, %v930
    %v935 = vadd.f32 %v386, %v931
    %v936 = vxor.u32 %v934, 2147483648
    %v937 = vxor.u32 %v935, 2147483648
    %v938 = vmul.f32 %v936, 1.442695
    %v939 = vpow.pop %v938
    %v940 = vmul.f32 %v937, 1.442695
    %v941 = vpow.pop %v940
    %v942 = vadd.f32 %v939, 1.0
    %v943 = vadd.f32 %v941, 1.0
    %v944 = vrcp.pop %v942
    %v945 = vmul.f32 1.0, %v944
    %v946 = vrcp.pop %v943
    %v947 = vmul.f32 1.0, %v946
    %v948 = vtanh.pop %v934
    %v949 = vtanh.pop %v935
    %v952 = vrot.slane %v795, 7
    %v953 = vrot.slane %v796, 7
    %v956 = vmul.f32 %v945, %v952
    %v957 = vmul.f32 %v947, %v953
    %960 = vrot.lane.b32.xlu0 %v948, 80
    %v961 = vpop.permute.xlu0 %960
    %962 = vrot.lane.b32.xlu0 %v949, 80
    %v963 = vpop.permute.xlu0 %962
    %v966 = vmul.f32 %v945, %v961
    %v967 = vmul.f32 %v947, %v963
    %970 = vrot.lane.b32.xlu0 %v966, 16
    %v971 = vpop.permute.xlu0 %970
    %972 = vrot.lane.b32.xlu0 %v967, 16
    %v973 = vpop.permute.xlu0 %972
    %v976 = vadd.f32 %v956, %v971
    %v977 = vadd.f32 %v957, %v973
    %v978 = vtanh.pop %v976
    %v979 = vtanh.pop %v977
    %982 = vrot.lane.b32.xlu0 %v978, 16
    %v983 = vpop.permute.xlu0 %982
    %984 = vrot.lane.b32.xlu0 %v979, 16
    %v985 = vpop.permute.xlu0 %984
    %v988 = vmul.f32 %v945, %v983
    %v989 = vmul.f32 %v947, %v985
    %v992 = vlaneseq
    %v993 = vshrl.u32 %v992, 7
    %v994 = vsub.s32 3, %v993
    %v995 = vrot.slane %v988, %v994
    %v996 = vlaneseq
    %v997 = vshrl.u32 %v996, 7
    %v998 = vsub.s32 3, %v997
    %v999 = vrot.slane %v989, %v998
    %v1000 = vsel %vm305, %v999, %v995
    %1001 = vrot.lane.b32.xlu0 %v1000, 96
    %v1002 = vpop.permute.xlu0 %1001
    %vm1004 = vcmask 126979
    %1005 = vst.msk [vmem:[#allocation3 - $0x3] sm:$0x18] %vm1004, %v1002
    %v1006 = vld [vmem:[#allocation3] sm:$0x3]
    %v1008 = vsel %vm455, %v1006, 0
    %1010 = vmatprep.subr.mxu0 0.0
    %1011 = vmatpush1.msra.mxu0 0.0
    %1012 = vmatprep.subr.mxu0 0.0
    %1013 = vmatpush1.msra.mxu0 0.0
    %1014 = vmatprep.subr.mxu0 0.0
    %1015 = vmatpush1.msra.mxu0 0.0
    %1016 = vmatprep.subr.mxu0 0.0
    %1017 = vmatpush1.msra.mxu0 0.0
    %1018 = vmatprep.subr.mxu0 0.0
    %1019 = vmatpush1.msra.mxu0 0.0
    %1020 = vmatprep.subr.mxu0 0.0
    %1021 = vmatpush1.msra.mxu0 0.0
    %1022 = vmatprep.subr.mxu0 0.0
    %1023 = vmatpush1.msra.mxu0 0.0
    %1024 = vmatprep.subr.mxu0 0.0
    %1025 = vmatpush1.msra.mxu0 0.0
    %1026 = vmatprep.subr.mxu0 0.0
    %1027 = vmatpush1.msra.mxu0 0.0
    %1028 = vmatprep.subr.mxu0 0.0
    %1029 = vmatpush1.msra.mxu0 0.0
    %1030 = vmatprep.subr.mxu0 0.0
    %1031 = vmatpush1.msra.mxu0 0.0
    %1032 = vmatprep.subr.mxu0 0.0
    %1033 = vmatpush1.msra.mxu0 0.0
    %1034 = vmatprep.subr.mxu0 0.0
    %1035 = vmatpush1.msra.mxu0 %v34
    %1036 = vmatprep.subr.mxu0 0.0
    %1037 = vmatpush1.msra.mxu0 %v33
    %1038 = vmatprep.subr.mxu0 0.0
    %1039 = vmatpush1.msra.mxu0 %v32
    %1040 = vmatprep.subr.mxu0 0.0
    %1041 = vmatpush1.msra.mxu0 %v31
    %1042 = vmatprep.subr.mxu0 0.0
    %1043 = vmatpush2.msra.mxu0 0.0
    %1044 = vmatprep.subr.mxu0 0.0
    %1045 = vmatpush2.msra.mxu0 0.0
    %1046 = vmatprep.subr.mxu0 0.0
    %1047 = vmatpush2.msra.mxu0 0.0
    %1048 = vmatprep.subr.mxu0 0.0
    %1049 = vmatpush2.msra.mxu0 0.0
    %1050 = vmatprep.subr.mxu0 0.0
    %1051 = vmatpush2.msra.mxu0 0.0
    %1052 = vmatprep.subr.mxu0 0.0
    %1053 = vmatpush2.msra.mxu0 0.0
    %1054 = vmatprep.subr.mxu0 0.0
    %1055 = vmatpush2.msra.mxu0 0.0
    %1056 = vmatprep.subr.mxu0 0.0
    %1057 = vmatpush2.msra.mxu0 0.0
    %1058 = vmatprep.subr.mxu0 0.0
    %1059 = vmatpush2.msra.mxu0 0.0
    %1060 = vmatprep.subr.mxu0 0.0
    %1061 = vmatpush2.msra.mxu0 0.0
    %1062 = vmatprep.subr.mxu0 0.0
    %1063 = vmatpush2.msra.mxu0 0.0
    %1064 = vmatprep.subr.mxu0 0.0
    %1065 = vmatpush2.msra.mxu0 0.0
    %1066 = vmatprep.subr.mxu0 0.0
    %1067 = vmatpush2.msra.mxu0 0.0
    %1068 = vmatprep.subr.mxu0 0.0
    %1069 = vmatpush2.msra.mxu0 0.0
    %1070 = vmatprep.subr.mxu0 0.0
    %1071 = vmatpush2.msra.mxu0 0.0
    %1072 = vmatprep.subr.mxu0 0.0
    %1073 = vmatpush2.msra.mxu0 0.0
    %1074 = vmatprep.mubr.f32.mxu0 0.0
    %1075 = vmatmul.mubr.f32.gmra.mxu0 %v1008
    %v1076 = vpop.f32.mrf.mxu0
    %v1077 = vadd.f32 0.0, %v1076
    %v1078 = vpop.f32.mrf.mxu0
    %1079 = vdwg.mxu0
    %v1080 = vadd.f32 %v1077, %v535
    %v1081 = vxor.u32 %v1080, 2147483648
    %v1082 = vmul.f32 %v1081, 1.442695
    %v1083 = vpow.pop %v1082
    %v1084 = vadd.f32 %v1083, 1.0
    %v1085 = vrcp.pop %v1084
    %v1086 = vmul.f32 1.0, %v1085
    %v1087 = vtanh.pop %v1080
    %v1088 = vmul.f32 %v1086, %v917
    %1090 = vrot.lane.b32.xlu0 %v1087, 80
    %v1091 = vpop.permute.xlu0 %1090
    %v1093 = vmul.f32 %v1086, %v1091
    %1095 = vrot.lane.b32.xlu0 %v1093, 16
    %v1096 = vpop.permute.xlu0 %1095
    %v1098 = vadd.f32 %v1088, %v1096
    %v1099 = vtanh.pop %v1098
    %1101 = vrot.lane.b32.xlu0 %v1099, 16
    %v1102 = vpop.permute.xlu0 %1101
    %v1104 = vmul.f32 %v1086, %v1102
    %1106 = vrot.lane.b32.xlu0 %v1104, 48
    %v1107 = vpop.permute.xlu0 %1106
    %1109 = vst.msk [vmem:[#allocation3] sm:$0x3] %vm566, %v1107
    %1111 = vset.pattern.permute.xlu0 0
    %1112 = vperm.xlu0 %1111, %v37
    %v1113 = vpop.permute.xlu0 %1112
    %1115 = vrot.lane.b32.xlu0 %v1104, 32
    %v1116 = vpop.permute.xlu0 %1115
    %vm1117 = vcmask 130048
    %v1119 = vsel %vm1117, %v36, 0
    %v1121 = vsel %vm1117, %v1116, 0
    %1123 = vmatprep.subr.mxu0 0.0
    %1124 = vmatpush1.xpose.msra.mxu0 0.0
    %1125 = vmatprep.subr.mxu0 0.0
    %1126 = vmatpush1.xpose.msra.mxu0 0.0
    %1127 = vmatprep.subr.mxu0 0.0
    %1128 = vmatpush1.xpose.msra.mxu0 0.0
    %1129 = vmatprep.subr.mxu0 0.0
    %1130 = vmatpush1.xpose.msra.mxu0 0.0
    %1131 = vmatprep.subr.mxu0 0.0
    %1132 = vmatpush1.xpose.msra.mxu0 0.0
    %1133 = vmatprep.subr.mxu0 0.0
    %1134 = vmatpush1.xpose.msra.mxu0 0.0
    %1135 = vmatprep.subr.mxu0 0.0
    %1136 = vmatpush1.xpose.msra.mxu0 0.0
    %1137 = vmatprep.subr.mxu0 0.0
    %1138 = vmatpush1.xpose.msra.mxu0 0.0
    %1139 = vmatprep.subr.mxu0 0.0
    %1140 = vmatpush1.xpose.msra.mxu0 0.0
    %1141 = vmatprep.subr.mxu0 0.0
    %1142 = vmatpush1.xpose.msra.mxu0 0.0
    %1143 = vmatprep.subr.mxu0 0.0
    %1144 = vmatpush1.xpose.msra.mxu0 0.0
    %1145 = vmatprep.subr.mxu0 0.0
    %1146 = vmatpush1.xpose.msra.mxu0 0.0
    %1147 = vmatprep.subr.mxu0 0.0
    %1148 = vmatpush1.xpose.msra.mxu0 0.0
    %1149 = vmatprep.subr.mxu0 0.0
    %1150 = vmatpush1.xpose.msra.mxu0 0.0
    %1151 = vmatprep.subr.mxu0 0.0
    %1152 = vmatpush1.xpose.msra.mxu0 0.0
    %1153 = vmatprep.subr.mxu0 0.0
    %1154 = vmatpush1.xpose.msra.mxu0 %v1121
    %1155 = vmatprep.subr.mxu0 0.0
    %1156 = vmatpush2.xpose.msra.mxu0 0.0
    %1157 = vmatprep.subr.mxu0 0.0
    %1158 = vmatpush2.xpose.msra.mxu0 0.0
    %1159 = vmatprep.subr.mxu0 0.0
    %1160 = vmatpush2.xpose.msra.mxu0 0.0
    %1161 = vmatprep.subr.mxu0 0.0
    %1162 = vmatpush2.xpose.msra.mxu0 0.0
    %1163 = vmatprep.subr.mxu0 0.0
    %1164 = vmatpush2.xpose.msra.mxu0 0.0
    %1165 = vmatprep.subr.mxu0 0.0
    %1166 = vmatpush2.xpose.msra.mxu0 0.0
    %1167 = vmatprep.subr.mxu0 0.0
    %1168 = vmatpush2.xpose.msra.mxu0 0.0
    %1169 = vmatprep.subr.mxu0 0.0
    %1170 = vmatpush2.xpose.msra.mxu0 0.0
    %1171 = vmatprep.subr.mxu0 0.0
    %1172 = vmatpush2.xpose.msra.mxu0 0.0
    %1173 = vmatprep.subr.mxu0 0.0
    %1174 = vmatpush2.xpose.msra.mxu0 0.0
    %1175 = vmatprep.subr.mxu0 0.0
    %1176 = vmatpush2.xpose.msra.mxu0 0.0
    %1177 = vmatprep.subr.mxu0 0.0
    %1178 = vmatpush2.xpose.msra.mxu0 0.0
    %1179 = vmatprep.subr.mxu0 0.0
    %1180 = vmatpush2.xpose.msra.mxu0 0.0
    %1181 = vmatprep.subr.mxu0 0.0
    %1182 = vmatpush2.xpose.msra.mxu0 0.0
    %1183 = vmatprep.subr.mxu0 0.0
    %1184 = vmatpush2.xpose.msra.mxu0 0.0
    %1185 = vmatprep.subr.mxu0 0.0
    %1186 = vmatpush2.xpose.msra.mxu0 0.0
    %1187 = vmatprep.mubr.f32.mxu0 0.0
    %1188 = vmatmul.mubr.f32.gmra.mxu0 %v1119
    %v1189 = vpop.f32.mrf.mxu0
    %v1190 = vadd.f32 %v1113, %v1189
    %v1191 = vpop.f32.mrf.mxu0
    %1192 = vdwg.mxu0
    %vm1193 = vcmask 8192
    %1194 = vst.msk [vmem:[#allocation7] sm:$0x1] %vm1193, %v1190
    // Predicated region
    $region14: #{tpu_custom_call.1} parent=1 // pred_check
      _
    $region15: #{tpu_custom_call.1} parent=1 // pred_check_branch
      %1196 = sbr.rel (0) target = $region17
    $region16: #{tpu_custom_call.1} parent=1 // pred_region
      %s1198 = ssub.s32 16, 16
      %1199 = vsyncadd [#allocation6], %s1198
      %s1201 = sshll.u32 [#allocation7], 4
      %s1202 = int_to_ptr.vmem [resolvable:$true] %s1201
      %1204 = dma.vmem_to_hbm [thread:$0]  %s1202, 16, %s2, [#allocation6]
    $region17: #{tpu_custom_call.1} parent=1 // pred_fallthru
      _
    // Predicated region
    $region18: #{tpu_custom_call.1} parent=1 // pred_check
      _
    $region19: #{tpu_custom_call.1} parent=1 // pred_check_branch
      %1206 = sbr.rel (0) target = $region21
    $region20: #{tpu_custom_call.1} parent=1 // pred_region
      %1207 = dma.done [#allocation6], 16
    $region21: #{tpu_custom_call.1} parent=1 // pred_fallthru
      _
    %1208 = vsyncpa [#allocation5], 1
    %1209 = vsyncpa [#allocation6], 1

</llo_original>
